<compile_context>
chip_gen: v7x
topology: tpu7x:2x2x1
jax: 0.10.0
libtpu: 0.0.40
codegen_flags: <defaults>
</compile_context>

<pallas_src>
import functools

import jax
import jax.numpy as jnp
from jax.experimental import pallas as pl
from jax.experimental.pallas import tpu as pltpu


def _selection_kernel(q_ref, hbias_ref, x_ref, o_ref, *attn_refs,
                      num_heads, num_bias_heads, head_dim, scale,
                      mxu_dtype, approx_recip):
    # q_ref:     (H, tq, hd)   static query rows (resident across batch)
    # hbias_ref: (Hb, tq, N)   bias + head_bias, pre-folded (resident)
    # x_ref:     (1, N, C)     keys/values for this batch element
    # o_ref:     (1, tq, C)    output rows
    # attn_refs: optional (1, H, tq, N) attention probabilities
    attn_ref = attn_refs[0] if attn_refs else None

    for h in range(num_heads):
        lo = h * head_dim
        # Per-head column slice straight from the VMEM ref -> no full (N, C)
        # value held live across the unrolled head loop (no spills).
        xh = x_ref[0, :, lo:lo + head_dim]                        # (N, hd)
        qh = q_ref[h].astype(jnp.float32) * scale                 # (tq, hd)

        if mxu_dtype is not None:
            xh_mm = xh.astype(mxu_dtype)
            qh_mm = qh.astype(mxu_dtype)
        else:
            xh_mm = xh.astype(jnp.float32)
            qh_mm = qh

        # logits = scale*q @ x_h^T + (bias + head_bias), f32 accumulation.
        logits = jnp.einsum("qd,kd->qk", qh_mm, xh_mm,
                            preferred_element_type=jnp.float32)   # (tq, N)
        bh = h if num_bias_heads == num_heads else 0
        logits = logits + hbias_ref[bh].astype(jnp.float32)

        # Numerically stable softmax in f32.
        m = jnp.max(logits, axis=-1, keepdims=True)
        e = jnp.exp(logits - m)
        denom = jnp.sum(e, axis=-1, keepdims=True)
        attn = e * pl.reciprocal(denom, approx=approx_recip)

        # TODO(synk): attn_drop (nn.Dropout) omitted — module default
        # attn_drop=0.0 / eval mode.
        if attn_ref is not None:
            attn_ref[0, h] = attn.astype(attn_ref.dtype)

        # y_h = attn @ x_h ; f32 accumulation on the MXU.
        p = attn.astype(mxu_dtype) if mxu_dtype is not None else attn
        yh = jnp.dot(p, xh_mm, preferred_element_type=jnp.float32)  # (tq, hd)

        # Store this head's columns directly into the VMEM output block; the
        # block's HBM writeback remains a single lane-dense (tq, C) stream.
        o_ref[0, :, lo:lo + head_dim] = yh.astype(o_ref.dtype)


def _physical_vmem_bytes():
    try:
        info = pltpu.get_tpu_info()
        cap = getattr(info, "vmem_capacity_bytes", None)
        if cap:
            return int(cap)
    except Exception:
        pass
    return 64 * 1024 * 1024  # conservative fallback (v7x per-core VMEM)


def _vmem_step_bytes(block_q, N, C, H, Hb, hd, x_bytes, attn_bytes):
    per_step = (
        H * block_q * hd * 4            # query (f32)
        + Hb * block_q * N * 4          # folded bias (f32)
        + N * C * x_bytes               # x block
        + block_q * C * x_bytes         # y block
        + H * block_q * N * attn_bytes  # attn block (0 when not returned)
    )
    return 2 * per_step                 # double buffering


def _pick_block_q(N, C, H, Hb, hd, x_bytes, attn_bytes, budget):
    cands = []
    if N <= 512:
        cands.append(N)
    for c in (512, 256, 128, 64, 32, 16, 8):
        if c <= N and N % c == 0 and c not in cands:
            cands.append(c)
    if not cands:
        cands = [N]
    for bq in cands:
        if _vmem_step_bytes(bq, N, C, H, Hb, hd, x_bytes, attn_bytes) <= budget:
            return bq
    return cands[-1]


def selection_forward(x, query, bias=None, head_bias=None, *, block_q=None,
                      precision="float32", return_attn=True, attn_dtype=None):
    """Pallas TPU forward for columnformers `Selection`.

    x: (B, N, C); query: (H, N, hd); bias: (N, N) or None;
    head_bias: (H, N, N) or None.
    Returns (y, state) with y (B, N, C); state["attn"] is (B, H, N, N)
    (omitted when return_attn=False).
    """
    B, N, C = x.shape
    H, Nq, hd = query.shape
    assert Nq == N and C == H * hd, "dim must equal num_heads * head_dim"
    scale = float(hd) ** -0.5

    # Fold the shared bias into the per-head bias on the host.
    if head_bias is not None:
        hb = head_bias.astype(jnp.float32)
        if bias is not None:
            hb = hb + bias.astype(jnp.float32)[None]
    elif bias is not None:
        hb = bias.astype(jnp.float32)[None]
    else:
        hb = jnp.zeros((1, N, N), jnp.float32)
    Hb = hb.shape[0]

    if precision == "bfloat16":
        mxu_dtype, approx_recip = jnp.bfloat16, True
        attn_dtype = jnp.bfloat16 if attn_dtype is None else attn_dtype
    else:
        mxu_dtype, approx_recip = None, False
        attn_dtype = jnp.float32 if attn_dtype is None else attn_dtype

    x_bytes = jnp.dtype(x.dtype).itemsize
    attn_bytes = jnp.dtype(attn_dtype).itemsize if return_attn else 0

    vmem_phys = _physical_vmem_bytes()
    budget = vmem_phys // 2
    if block_q is None:
        block_q = _pick_block_q(N, C, H, Hb, hd, x_bytes, attn_bytes, budget)
    assert N % block_q == 0 and (block_q == N or block_q % 8 == 0)
    n_q = N // block_q

    step_bytes = _vmem_step_bytes(block_q, N, C, H, Hb, hd, x_bytes, attn_bytes)
    vmem_limit = min(int(vmem_phys * 0.85),
                     max(32 * 1024 * 1024, step_bytes + 16 * 1024 * 1024))

    # Grid order: batch innermost when the query axis is tiled so the static
    # query / folded-bias blocks stay resident and only x is re-fetched.
    if n_q > 1:
        grid = (n_q, B)
        q_map = lambda i, b: (0, i, 0)
        hb_map = lambda i, b: (0, i, 0)
        x_map = lambda i, b: (b, 0, 0)
        y_map = lambda i, b: (b, i, 0)
        a_map = lambda i, b: (b, 0, i, 0)
    else:
        grid = (B, n_q)
        q_map = lambda b, i: (0, i, 0)
        hb_map = lambda b, i: (0, i, 0)
        x_map = lambda b, i: (b, 0, 0)
        y_map = lambda b, i: (b, i, 0)
        a_map = lambda b, i: (b, 0, i, 0)

    out_shape = [jax.ShapeDtypeStruct((B, N, C), x.dtype)]
    out_specs = [pl.BlockSpec((1, block_q, C), y_map)]
    if return_attn:
        out_shape.append(jax.ShapeDtypeStruct((B, H, N, N), attn_dtype))
        out_specs.append(pl.BlockSpec((1, H, block_q, N), a_map))

    kernel = functools.partial(
        _selection_kernel, num_heads=H, num_bias_heads=Hb, head_dim=hd,
        scale=scale, mxu_dtype=mxu_dtype, approx_recip=approx_recip)

    results = pl.pallas_call(
        kernel,
        out_shape=tuple(out_shape),
        grid_spec=pltpu.PrefetchScalarGridSpec(
            num_scalar_prefetch=0,
            grid=grid,
            in_specs=[
                pl.BlockSpec((H, block_q, hd), q_map),    # query
                pl.BlockSpec((Hb, block_q, N), hb_map),   # bias + head_bias
                pl.BlockSpec((1, N, C), x_map),           # x (full keys)
            ],
            out_specs=out_specs,
        ),
        compiler_params=pltpu.CompilerParams(
            # All output blocks are disjoint across both grid axes.
            dimension_semantics=("parallel", "parallel"),
            vmem_limit_bytes=int(vmem_limit),
        ),
    )(query, hb, x)

    if return_attn:
        y, attn = results
        return y, {"attn": attn}
    (y,) = results
    return y, {}


def _reference(x, query, bias, head_bias):
    B, N, C = x.shape
    H, _, hd = query.shape
    scale = float(hd) ** -0.5
    xh = x.reshape(B, N, H, hd).transpose(0, 2, 1, 3)          # (B, H, N, hd)
    attn = jnp.einsum("hqd,bhkd->bhqk", scale * query, xh)
    if bias is not None:
        attn = attn + bias[None, None]
    if head_bias is not None:
        attn = attn + head_bias[None]
    attn = jax.nn.softmax(attn, axis=-1)
    y = jnp.einsum("bhqk,bhkd->bhqd", attn, xh)
    y = y.transpose(0, 2, 1, 3).reshape(B, N, C)
    return y, attn


if __name__ == "__main__":
    # Module config: seq_len=8, dim=32, num_heads=8 -> head_dim=4; batch=2.
    B, N, C, H = 2, 8, 32, 8
    hd = C // H

    key = jax.random.PRNGKey(0)
    kx, kq, kb, kh = jax.random.split(key, 4)

    x = jax.random.normal(kx, (B, N, C), dtype=jnp.float32)
    query = 0.02 * jax.random.truncated_normal(kq, -2.0, 2.0, (H, N, hd),
                                               dtype=jnp.float32)
    bias = 0.1 * jax.random.normal(kb, (N, N), dtype=jnp.float32)
    head_bias = 0.1 * jax.random.normal(kh, (H, N, N), dtype=jnp.float32)

    y_ref, attn_ref = _reference(x, query, bias, head_bias)

    # 1) Exact f32 path — matches the PyTorch module numerics.
    y, state = selection_forward(x, query, bias, head_bias)
    y = jax.block_until_ready(y)
    attn = jax.block_until_ready(state["attn"])
    assert y.shape == (B, N, C) and attn.shape == (B, H, N, N)
    assert jnp.allclose(y, y_ref, atol=1e-5, rtol=1e-5)
    assert jnp.allclose(attn, attn_ref, atol=1e-5, rtol=1e-5)

    # 2) Fast path: bf16 MXU operands, bf16 attn writeback, EUP reciprocal.
    y_f, state_f = selection_forward(x, query, bias, head_bias,
                                     precision="bfloat16")
    y_f = jax.block_until_ready(y_f)
    attn_f = jax.block_until_ready(state_f["attn"]).astype(jnp.float32)
    assert jnp.allclose(y_f, y_ref, atol=5e-2, rtol=5e-2)
    assert jnp.allclose(attn_f, attn_ref, atol=2e-2, rtol=2e-2)

    # 3) No-attn path (drops the dominant (B,H,N,N) HBM writeback).
    y_na, _ = selection_forward(x, query, bias, head_bias, return_attn=False)
    y_na = jax.block_until_ready(y_na)
    assert jnp.allclose(y_na, y_ref, atol=1e-5, rtol=1e-5)

    print("KERNEL_OK")
</pallas_src>

<mosaic_0001>
module attributes {stable_mosaic.version = 11 : i64} {
  func.func @_selection_kernel(%arg0: i32, %arg1: i32, %arg2: memref<8x8x4xf32, #tpu.memory_space<vmem>>, %arg3: memref<8x8x8xf32, #tpu.memory_space<vmem>>, %arg4: memref<1x8x32xf32, #tpu.memory_space<vmem>>, %arg5: memref<1x8x32xf32, #tpu.memory_space<vmem>>, %arg6: memref<1x8x8x8xf32, #tpu.memory_space<vmem>>) attributes {dimension_semantics = [#tpu.dimension_semantics<parallel>, #tpu.dimension_semantics<parallel>], iteration_bounds = array<i64: 2, 1>, scalar_prefetch = 0 : i64, scratch_operands = 0 : i64, tpu.core_type = #tpu.core_type<tc>, window_params = [{transform_indices = @transform_0, window_bounds = array<i64: 8, 8, 4>}, {transform_indices = @transform_1, window_bounds = array<i64: 8, 8, 8>}, {transform_indices = @transform_2, window_bounds = array<i64: 1, 8, 32>}, {transform_indices = @transform_3, window_bounds = array<i64: 1, 8, 32>}, {transform_indices = @transform_4, window_bounds = array<i64: 1, 8, 8, 8>}]} {
    %c0 = arith.constant 0 : index
    %c0_0 = arith.constant 0 : index
    %c0_1 = arith.constant 0 : index
    %0 = vector.load %arg4[%c0, %c0_0, %c0_1] : memref<1x8x32xf32, #tpu.memory_space<vmem>>, vector<1x8x4xf32>
    %1 = vector.shape_cast %0 : vector<1x8x4xf32> to vector<8x4xf32>
    %c0_2 = arith.constant 0 : index
    %c0_3 = arith.constant 0 : index
    %c0_4 = arith.constant 0 : index
    %2 = vector.load %arg2[%c0_2, %c0_3, %c0_4] : memref<8x8x4xf32, #tpu.memory_space<vmem>>, vector<1x8x4xf32>
    %3 = vector.shape_cast %2 : vector<1x8x4xf32> to vector<8x4xf32>
    %cst = arith.constant 5.000000e-01 : f32
    %4 = vector.broadcast %cst : f32 to vector<8x4xf32>
    %5 = arith.mulf %3, %4 : vector<8x4xf32>
    "tpu.trace_start"() <{level = 10 : i32, message = "qd,kd->qk"}> : () -> ()
    %cst_5 = arith.constant dense<0.000000e+00> : vector<8x8xf32>
    %6 = tpu.matmul %5, %1, %cst_5 {dimension_numbers = #tpu.dot_dimension_numbers<[1], [1], [0], [0], [0, 0, 1, 0], [], []>} : vector<8x4xf32>, vector<8x4xf32>, vector<8x8xf32> -> vector<8x8xf32>
    "tpu.trace_stop"() : () -> ()
    %c0_6 = arith.constant 0 : index
    %c0_7 = arith.constant 0 : index
    %c0_8 = arith.constant 0 : index
    %7 = vector.load %arg3[%c0_6, %c0_7, %c0_8] : memref<8x8x8xf32, #tpu.memory_space<vmem>>, vector<1x8x8xf32>
    %8 = vector.shape_cast %7 : vector<1x8x8xf32> to vector<8x8xf32>
    %9 = arith.addf %6, %8 : vector<8x8xf32>
    %cst_9 = arith.constant dense<0xFF800000> : vector<8xf32>
    %10 = vector.multi_reduction <maximumf>, %9, %cst_9 [1] : vector<8x8xf32> to vector<8xf32>
    %11 = vector.shape_cast %10 : vector<8xf32> to vector<8x1xf32>
    %12 = vector.broadcast %11 : vector<8x1xf32> to vector<8x8xf32>
    %13 = arith.subf %9, %12 : vector<8x8xf32>
    %14 = math.exp %13 : vector<8x8xf32>
    %cst_10 = arith.constant dense<0.000000e+00> : vector<8xf32>
    %15 = vector.multi_reduction <add>, %14, %cst_10 [1] : vector<8x8xf32> to vector<8xf32>
    %16 = vector.shape_cast %15 : vector<8xf32> to vector<8x1xf32>
    %17 = tpu.reciprocal %16 : vector<8x1xf32> -> vector<8x1xf32>
    %18 = vector.broadcast %17 : vector<8x1xf32> to vector<8x8xf32>
    %19 = arith.mulf %14, %18 : vector<8x8xf32>
    %c0_11 = arith.constant 0 : index
    %c0_12 = arith.constant 0 : index
    %c0_13 = arith.constant 0 : index
    %c0_14 = arith.constant 0 : index
    %20 = vector.load %arg6[%c0_11, %c0_12, %c0_13, %c0_14] : memref<1x8x8x8xf32, #tpu.memory_space<vmem>>, vector<1x1x8x8xf32>
    %21 = vector.shape_cast %20 : vector<1x1x8x8xf32> to vector<8x8xf32>
    %22 = vector.shape_cast %19 : vector<8x8xf32> to vector<1x1x8x8xf32>
    tpu.vector_store %arg6[%c0_11, %c0_12, %c0_13, %c0_14], %22 {strides = array<i32>} : memref<1x8x8x8xf32, #tpu.memory_space<vmem>>, vector<1x1x8x8xf32>,
    %cst_15 = arith.constant dense<0.000000e+00> : vector<8x4xf32>
    %23 = tpu.matmul %19, %1, %cst_15 {dimension_numbers = #tpu.dot_dimension_numbers<[1], [0], [0], [1], [0, 0, 1, 1], [], []>} : vector<8x8xf32>, vector<8x4xf32>, vector<8x4xf32> -> vector<8x4xf32>
    %c0_16 = arith.constant 0 : index
    %c0_17 = arith.constant 0 : index
    %c0_18 = arith.constant 0 : index
    %24 = vector.load %arg5[%c0_16, %c0_17, %c0_18] : memref<1x8x32xf32, #tpu.memory_space<vmem>>, vector<1x8x4xf32>
    %25 = vector.shape_cast %24 : vector<1x8x4xf32> to vector<8x4xf32>
    %26 = vector.shape_cast %23 : vector<8x4xf32> to vector<1x8x4xf32>
    tpu.vector_store %arg5[%c0_16, %c0_17, %c0_18], %26 {strides = array<i32>} : memref<1x8x32xf32, #tpu.memory_space<vmem>>, vector<1x8x4xf32>,
    %c0_19 = arith.constant 0 : index
    %c0_20 = arith.constant 0 : index
    %c4 = arith.constant 4 : index
    %27 = vector.load %arg4[%c0_19, %c0_20, %c4] : memref<1x8x32xf32, #tpu.memory_space<vmem>>, vector<1x8x4xf32>
    %28 = vector.shape_cast %27 : vector<1x8x4xf32> to vector<8x4xf32>
    %c1 = arith.constant 1 : index
    %c0_21 = arith.constant 0 : index
    %c0_22 = arith.constant 0 : index
    %29 = vector.load %arg2[%c1, %c0_21, %c0_22] : memref<8x8x4xf32, #tpu.memory_space<vmem>>, vector<1x8x4xf32>
    %30 = vector.shape_cast %29 : vector<1x8x4xf32> to vector<8x4xf32>
    %cst_23 = arith.constant 5.000000e-01 : f32
    %31 = vector.broadcast %cst_23 : f32 to vector<8x4xf32>
    %32 = arith.mulf %30, %31 : vector<8x4xf32>
    "tpu.trace_start"() <{level = 10 : i32, message = "qd,kd->qk"}> : () -> ()
    %cst_24 = arith.constant dense<0.000000e+00> : vector<8x8xf32>
    %33 = tpu.matmul %32, %28, %cst_24 {dimension_numbers = #tpu.dot_dimension_numbers<[1], [1], [0], [0], [0, 0, 1, 0], [], []>} : vector<8x4xf32>, vector<8x4xf32>, vector<8x8xf32> -> vector<8x8xf32>
    "tpu.trace_stop"() : () -> ()
    %c1_25 = arith.constant 1 : index
    %c0_26 = arith.constant 0 : index
    %c0_27 = arith.constant 0 : index
    %34 = vector.load %arg3[%c1_25, %c0_26, %c0_27] : memref<8x8x8xf32, #tpu.memory_space<vmem>>, vector<1x8x8xf32>
    %35 = vector.shape_cast %34 : vector<1x8x8xf32> to vector<8x8xf32>
    %36 = arith.addf %33, %35 : vector<8x8xf32>
    %cst_28 = arith.constant dense<0xFF800000> : vector<8xf32>
    %37 = vector.multi_reduction <maximumf>, %36, %cst_28 [1] : vector<8x8xf32> to vector<8xf32>
    %38 = vector.shape_cast %37 : vector<8xf32> to vector<8x1xf32>
    %39 = vector.broadcast %38 : vector<8x1xf32> to vector<8x8xf32>
    %40 = arith.subf %36, %39 : vector<8x8xf32>
    %41 = math.exp %40 : vector<8x8xf32>
    %cst_29 = arith.constant dense<0.000000e+00> : vector<8xf32>
    %42 = vector.multi_reduction <add>, %41, %cst_29 [1] : vector<8x8xf32> to vector<8xf32>
    %43 = vector.shape_cast %42 : vector<8xf32> to vector<8x1xf32>
    %44 = tpu.reciprocal %43 : vector<8x1xf32> -> vector<8x1xf32>
    %45 = vector.broadcast %44 : vector<8x1xf32> to vector<8x8xf32>
    %46 = arith.mulf %41, %45 : vector<8x8xf32>
    %c0_30 = arith.constant 0 : index
    %c1_31 = arith.constant 1 : index
    %c0_32 = arith.constant 0 : index
    %c0_33 = arith.constant 0 : index
    %47 = vector.load %arg6[%c0_30, %c1_31, %c0_32, %c0_33] : memref<1x8x8x8xf32, #tpu.memory_space<vmem>>, vector<1x1x8x8xf32>
    %48 = vector.shape_cast %47 : vector<1x1x8x8xf32> to vector<8x8xf32>
    %49 = vector.shape_cast %46 : vector<8x8xf32> to vector<1x1x8x8xf32>
    tpu.vector_store %arg6[%c0_30, %c1_31, %c0_32, %c0_33], %49 {strides = array<i32>} : memref<1x8x8x8xf32, #tpu.memory_space<vmem>>, vector<1x1x8x8xf32>,
    %cst_34 = arith.constant dense<0.000000e+00> : vector<8x4xf32>
    %50 = tpu.matmul %46, %28, %cst_34 {dimension_numbers = #tpu.dot_dimension_numbers<[1], [0], [0], [1], [0, 0, 1, 1], [], []>} : vector<8x8xf32>, vector<8x4xf32>, vector<8x4xf32> -> vector<8x4xf32>
    %c0_35 = arith.constant 0 : index
    %c0_36 = arith.constant 0 : index
    %c4_37 = arith.constant 4 : index
    %51 = vector.load %arg5[%c0_35, %c0_36, %c4_37] : memref<1x8x32xf32, #tpu.memory_space<vmem>>, vector<1x8x4xf32>
    %52 = vector.shape_cast %51 : vector<1x8x4xf32> to vector<8x4xf32>
    %53 = vector.shape_cast %50 : vector<8x4xf32> to vector<1x8x4xf32>
    tpu.vector_store %arg5[%c0_35, %c0_36, %c4_37], %53 {strides = array<i32>} : memref<1x8x32xf32, #tpu.memory_space<vmem>>, vector<1x8x4xf32>,
    %c0_38 = arith.constant 0 : index
    %c0_39 = arith.constant 0 : index
    %c8 = arith.constant 8 : index
    %54 = vector.load %arg4[%c0_38, %c0_39, %c8] : memref<1x8x32xf32, #tpu.memory_space<vmem>>, vector<1x8x4xf32>
    %55 = vector.shape_cast %54 : vector<1x8x4xf32> to vector<8x4xf32>
    %c2 = arith.constant 2 : index
    %c0_40 = arith.constant 0 : index
    %c0_41 = arith.constant 0 : index
    %56 = vector.load %arg2[%c2, %c0_40, %c0_41] : memref<8x8x4xf32, #tpu.memory_space<vmem>>, vector<1x8x4xf32>
    %57 = vector.shape_cast %56 : vector<1x8x4xf32> to vector<8x4xf32>
    %cst_42 = arith.constant 5.000000e-01 : f32
    %58 = vector.broadcast %cst_42 : f32 to vector<8x4xf32>
    %59 = arith.mulf %57, %58 : vector<8x4xf32>
    "tpu.trace_start"() <{level = 10 : i32, message = "qd,kd->qk"}> : () -> ()
    %cst_43 = arith.constant dense<0.000000e+00> : vector<8x8xf32>
    %60 = tpu.matmul %59, %55, %cst_43 {dimension_numbers = #tpu.dot_dimension_numbers<[1], [1], [0], [0], [0, 0, 1, 0], [], []>} : vector<8x4xf32>, vector<8x4xf32>, vector<8x8xf32> -> vector<8x8xf32>
    "tpu.trace_stop"() : () -> ()
    %c2_44 = arith.constant 2 : index
    %c0_45 = arith.constant 0 : index
    %c0_46 = arith.constant 0 : index
    %61 = vector.load %arg3[%c2_44, %c0_45, %c0_46] : memref<8x8x8xf32, #tpu.memory_space<vmem>>, vector<1x8x8xf32>
    %62 = vector.shape_cast %61 : vector<1x8x8xf32> to vector<8x8xf32>
    %63 = arith.addf %60, %62 : vector<8x8xf32>
    %cst_47 = arith.constant dense<0xFF800000> : vector<8xf32>
    %64 = vector.multi_reduction <maximumf>, %63, %cst_47 [1] : vector<8x8xf32> to vector<8xf32>
    %65 = vector.shape_cast %64 : vector<8xf32> to vector<8x1xf32>
    %66 = vector.broadcast %65 : vector<8x1xf32> to vector<8x8xf32>
    %67 = arith.subf %63, %66 : vector<8x8xf32>
    %68 = math.exp %67 : vector<8x8xf32>
    %cst_48 = arith.constant dense<0.000000e+00> : vector<8xf32>
    %69 = vector.multi_reduction <add>, %68, %cst_48 [1] : vector<8x8xf32> to vector<8xf32>
    %70 = vector.shape_cast %69 : vector<8xf32> to vector<8x1xf32>
    %71 = tpu.reciprocal %70 : vector<8x1xf32> -> vector<8x1xf32>
    %72 = vector.broadcast %71 : vector<8x1xf32> to vector<8x8xf32>
    %73 = arith.mulf %68, %72 : vector<8x8xf32>
    %c0_49 = arith.constant 0 : index
    %c2_50 = arith.constant 2 : index
    %c0_51 = arith.constant 0 : index
    %c0_52 = arith.constant 0 : index
    %74 = vector.load %arg6[%c0_49, %c2_50, %c0_51, %c0_52] : memref<1x8x8x8xf32, #tpu.memory_space<vmem>>, vector<1x1x8x8xf32>
    %75 = vector.shape_cast %74 : vector<1x1x8x8xf32> to vector<8x8xf32>
    %76 = vector.shape_cast %73 : vector<8x8xf32> to vector<1x1x8x8xf32>
    tpu.vector_store %arg6[%c0_49, %c2_50, %c0_51, %c0_52], %76 {strides = array<i32>} : memref<1x8x8x8xf32, #tpu.memory_space<vmem>>, vector<1x1x8x8xf32>,
    %cst_53 = arith.constant dense<0.000000e+00> : vector<8x4xf32>
    %77 = tpu.matmul %73, %55, %cst_53 {dimension_numbers = #tpu.dot_dimension_numbers<[1], [0], [0], [1], [0, 0, 1, 1], [], []>} : vector<8x8xf32>, vector<8x4xf32>, vector<8x4xf32> -> vector<8x4xf32>
    %c0_54 = arith.constant 0 : index
    %c0_55 = arith.constant 0 : index
    %c8_56 = arith.constant 8 : index
    %78 = vector.load %arg5[%c0_54, %c0_55, %c8_56] : memref<1x8x32xf32, #tpu.memory_space<vmem>>, vector<1x8x4xf32>
    %79 = vector.shape_cast %78 : vector<1x8x4xf32> to vector<8x4xf32>
    %80 = vector.shape_cast %77 : vector<8x4xf32> to vector<1x8x4xf32>
    tpu.vector_store %arg5[%c0_54, %c0_55, %c8_56], %80 {strides = array<i32>} : memref<1x8x32xf32, #tpu.memory_space<vmem>>, vector<1x8x4xf32>,
    %c0_57 = arith.constant 0 : index
    %c0_58 = arith.constant 0 : index
    %c12 = arith.constant 12 : index
    %81 = vector.load %arg4[%c0_57, %c0_58, %c12] : memref<1x8x32xf32, #tpu.memory_space<vmem>>, vector<1x8x4xf32>
    %82 = vector.shape_cast %81 : vector<1x8x4xf32> to vector<8x4xf32>
    %c3 = arith.constant 3 : index
    %c0_59 = arith.constant 0 : index
    %c0_60 = arith.constant 0 : index
    %83 = vector.load %arg2[%c3, %c0_59, %c0_60] : memref<8x8x4xf32, #tpu.memory_space<vmem>>, vector<1x8x4xf32>
    %84 = vector.shape_cast %83 : vector<1x8x4xf32> to vector<8x4xf32>
    %cst_61 = arith.constant 5.000000e-01 : f32
    %85 = vector.broadcast %cst_61 : f32 to vector<8x4xf32>
    %86 = arith.mulf %84, %85 : vector<8x4xf32>
    "tpu.trace_start"() <{level = 10 : i32, message = "qd,kd->qk"}> : () -> ()
    %cst_62 = arith.constant dense<0.000000e+00> : vector<8x8xf32>
    %87 = tpu.matmul %86, %82, %cst_62 {dimension_numbers = #tpu.dot_dimension_numbers<[1], [1], [0], [0], [0, 0, 1, 0], [], []>} : vector<8x4xf32>, vector<8x4xf32>, vector<8x8xf32> -> vector<8x8xf32>
    "tpu.trace_stop"() : () -> ()
    %c3_63 = arith.constant 3 : index
    %c0_64 = arith.constant 0 : index
    %c0_65 = arith.constant 0 : index
    %88 = vector.load %arg3[%c3_63, %c0_64, %c0_65] : memref<8x8x8xf32, #tpu.memory_space<vmem>>, vector<1x8x8xf32>
    %89 = vector.shape_cast %88 : vector<1x8x8xf32> to vector<8x8xf32>
    %90 = arith.addf %87, %89 : vector<8x8xf32>
    %cst_66 = arith.constant dense<0xFF800000> : vector<8xf32>
    %91 = vector.multi_reduction <maximumf>, %90, %cst_66 [1] : vector<8x8xf32> to vector<8xf32>
    %92 = vector.shape_cast %91 : vector<8xf32> to vector<8x1xf32>
    %93 = vector.broadcast %92 : vector<8x1xf32> to vector<8x8xf32>
    %94 = arith.subf %90, %93 : vector<8x8xf32>
    %95 = math.exp %94 : vector<8x8xf32>
    %cst_67 = arith.constant dense<0.000000e+00> : vector<8xf32>
    %96 = vector.multi_reduction <add>, %95, %cst_67 [1] : vector<8x8xf32> to vector<8xf32>
    %97 = vector.shape_cast %96 : vector<8xf32> to vector<8x1xf32>
    %98 = tpu.reciprocal %97 : vector<8x1xf32> -> vector<8x1xf32>
    %99 = vector.broadcast %98 : vector<8x1xf32> to vector<8x8xf32>
    %100 = arith.mulf %95, %99 : vector<8x8xf32>
    %c0_68 = arith.constant 0 : index
    %c3_69 = arith.constant 3 : index
    %c0_70 = arith.constant 0 : index
    %c0_71 = arith.constant 0 : index
    %101 = vector.load %arg6[%c0_68, %c3_69, %c0_70, %c0_71] : memref<1x8x8x8xf32, #tpu.memory_space<vmem>>, vector<1x1x8x8xf32>
    %102 = vector.shape_cast %101 : vector<1x1x8x8xf32> to vector<8x8xf32>
    %103 = vector.shape_cast %100 : vector<8x8xf32> to vector<1x1x8x8xf32>
    tpu.vector_store %arg6[%c0_68, %c3_69, %c0_70, %c0_71], %103 {strides = array<i32>} : memref<1x8x8x8xf32, #tpu.memory_space<vmem>>, vector<1x1x8x8xf32>,
    %cst_72 = arith.constant dense<0.000000e+00> : vector<8x4xf32>
    %104 = tpu.matmul %100, %82, %cst_72 {dimension_numbers = #tpu.dot_dimension_numbers<[1], [0], [0], [1], [0, 0, 1, 1], [], []>} : vector<8x8xf32>, vector<8x4xf32>, vector<8x4xf32> -> vector<8x4xf32>
    %c0_73 = arith.constant 0 : index
    %c0_74 = arith.constant 0 : index
    %c12_75 = arith.constant 12 : index
    %105 = vector.load %arg5[%c0_73, %c0_74, %c12_75] : memref<1x8x32xf32, #tpu.memory_space<vmem>>, vector<1x8x4xf32>
    %106 = vector.shape_cast %105 : vector<1x8x4xf32> to vector<8x4xf32>
    %107 = vector.shape_cast %104 : vector<8x4xf32> to vector<1x8x4xf32>
    tpu.vector_store %arg5[%c0_73, %c0_74, %c12_75], %107 {strides = array<i32>} : memref<1x8x32xf32, #tpu.memory_space<vmem>>, vector<1x8x4xf32>,
    %c0_76 = arith.constant 0 : index
    %c0_77 = arith.constant 0 : index
    %c16 = arith.constant 16 : index
    %108 = vector.load %arg4[%c0_76, %c0_77, %c16] : memref<1x8x32xf32, #tpu.memory_space<vmem>>, vector<1x8x4xf32>
    %109 = vector.shape_cast %108 : vector<1x8x4xf32> to vector<8x4xf32>
    %c4_78 = arith.constant 4 : index
    %c0_79 = arith.constant 0 : index
    %c0_80 = arith.constant 0 : index
    %110 = vector.load %arg2[%c4_78, %c0_79, %c0_80] : memref<8x8x4xf32, #tpu.memory_space<vmem>>, vector<1x8x4xf32>
    %111 = vector.shape_cast %110 : vector<1x8x4xf32> to vector<8x4xf32>
    %cst_81 = arith.constant 5.000000e-01 : f32
    %112 = vector.broadcast %cst_81 : f32 to vector<8x4xf32>
    %113 = arith.mulf %111, %112 : vector<8x4xf32>
    "tpu.trace_start"() <{level = 10 : i32, message = "qd,kd->qk"}> : () -> ()
    %cst_82 = arith.constant dense<0.000000e+00> : vector<8x8xf32>
    %114 = tpu.matmul %113, %109, %cst_82 {dimension_numbers = #tpu.dot_dimension_numbers<[1], [1], [0], [0], [0, 0, 1, 0], [], []>} : vector<8x4xf32>, vector<8x4xf32>, vector<8x8xf32> -> vector<8x8xf32>
    "tpu.trace_stop"() : () -> ()
    %c4_83 = arith.constant 4 : index
    %c0_84 = arith.constant 0 : index
    %c0_85 = arith.constant 0 : index
    %115 = vector.load %arg3[%c4_83, %c0_84, %c0_85] : memref<8x8x8xf32, #tpu.memory_space<vmem>>, vector<1x8x8xf32>
    %116 = vector.shape_cast %115 : vector<1x8x8xf32> to vector<8x8xf32>
    %117 = arith.addf %114, %116 : vector<8x8xf32>
    %cst_86 = arith.constant dense<0xFF800000> : vector<8xf32>
    %118 = vector.multi_reduction <maximumf>, %117, %cst_86 [1] : vector<8x8xf32> to vector<8xf32>
    %119 = vector.shape_cast %118 : vector<8xf32> to vector<8x1xf32>
    %120 = vector.broadcast %119 : vector<8x1xf32> to vector<8x8xf32>
    %121 = arith.subf %117, %120 : vector<8x8xf32>
    %122 = math.exp %121 : vector<8x8xf32>
    %cst_87 = arith.constant dense<0.000000e+00> : vector<8xf32>
    %123 = vector.multi_reduction <add>, %122, %cst_87 [1] : vector<8x8xf32> to vector<8xf32>
    %124 = vector.shape_cast %123 : vector<8xf32> to vector<8x1xf32>
    %125 = tpu.reciprocal %124 : vector<8x1xf32> -> vector<8x1xf32>
    %126 = vector.broadcast %125 : vector<8x1xf32> to vector<8x8xf32>
    %127 = arith.mulf %122, %126 : vector<8x8xf32>
    %c0_88 = arith.constant 0 : index
    %c4_89 = arith.constant 4 : index
    %c0_90 = arith.constant 0 : index
    %c0_91 = arith.constant 0 : index
    %128 = vector.load %arg6[%c0_88, %c4_89, %c0_90, %c0_91] : memref<1x8x8x8xf32, #tpu.memory_space<vmem>>, vector<1x1x8x8xf32>
    %129 = vector.shape_cast %128 : vector<1x1x8x8xf32> to vector<8x8xf32>
    %130 = vector.shape_cast %127 : vector<8x8xf32> to vector<1x1x8x8xf32>
    tpu.vector_store %arg6[%c0_88, %c4_89, %c0_90, %c0_91], %130 {strides = array<i32>} : memref<1x8x8x8xf32, #tpu.memory_space<vmem>>, vector<1x1x8x8xf32>,
    %cst_92 = arith.constant dense<0.000000e+00> : vector<8x4xf32>
    %131 = tpu.matmul %127, %109, %cst_92 {dimension_numbers = #tpu.dot_dimension_numbers<[1], [0], [0], [1], [0, 0, 1, 1], [], []>} : vector<8x8xf32>, vector<8x4xf32>, vector<8x4xf32> -> vector<8x4xf32>
    %c0_93 = arith.constant 0 : index
    %c0_94 = arith.constant 0 : index
    %c16_95 = arith.constant 16 : index
    %132 = vector.load %arg5[%c0_93, %c0_94, %c16_95] : memref<1x8x32xf32, #tpu.memory_space<vmem>>, vector<1x8x4xf32>
    %133 = vector.shape_cast %132 : vector<1x8x4xf32> to vector<8x4xf32>
    %134 = vector.shape_cast %131 : vector<8x4xf32> to vector<1x8x4xf32>
    tpu.vector_store %arg5[%c0_93, %c0_94, %c16_95], %134 {strides = array<i32>} : memref<1x8x32xf32, #tpu.memory_space<vmem>>, vector<1x8x4xf32>,
    %c0_96 = arith.constant 0 : index
    %c0_97 = arith.constant 0 : index
    %c20 = arith.constant 20 : index
    %135 = vector.load %arg4[%c0_96, %c0_97, %c20] : memref<1x8x32xf32, #tpu.memory_space<vmem>>, vector<1x8x4xf32>
    %136 = vector.shape_cast %135 : vector<1x8x4xf32> to vector<8x4xf32>
    %c5 = arith.constant 5 : index
    %c0_98 = arith.constant 0 : index
    %c0_99 = arith.constant 0 : index
    %137 = vector.load %arg2[%c5, %c0_98, %c0_99] : memref<8x8x4xf32, #tpu.memory_space<vmem>>, vector<1x8x4xf32>
    %138 = vector.shape_cast %137 : vector<1x8x4xf32> to vector<8x4xf32>
    %cst_100 = arith.constant 5.000000e-01 : f32
    %139 = vector.broadcast %cst_100 : f32 to vector<8x4xf32>
    %140 = arith.mulf %138, %139 : vector<8x4xf32>
    "tpu.trace_start"() <{level = 10 : i32, message = "qd,kd->qk"}> : () -> ()
    %cst_101 = arith.constant dense<0.000000e+00> : vector<8x8xf32>
    %141 = tpu.matmul %140, %136, %cst_101 {dimension_numbers = #tpu.dot_dimension_numbers<[1], [1], [0], [0], [0, 0, 1, 0], [], []>} : vector<8x4xf32>, vector<8x4xf32>, vector<8x8xf32> -> vector<8x8xf32>
    "tpu.trace_stop"() : () -> ()
    %c5_102 = arith.constant 5 : index
    %c0_103 = arith.constant 0 : index
    %c0_104 = arith.constant 0 : index
    %142 = vector.load %arg3[%c5_102, %c0_103, %c0_104] : memref<8x8x8xf32, #tpu.memory_space<vmem>>, vector<1x8x8xf32>
    %143 = vector.shape_cast %142 : vector<1x8x8xf32> to vector<8x8xf32>
    %144 = arith.addf %141, %143 : vector<8x8xf32>
    %cst_105 = arith.constant dense<0xFF800000> : vector<8xf32>
    %145 = vector.multi_reduction <maximumf>, %144, %cst_105 [1] : vector<8x8xf32> to vector<8xf32>
    %146 = vector.shape_cast %145 : vector<8xf32> to vector<8x1xf32>
    %147 = vector.broadcast %146 : vector<8x1xf32> to vector<8x8xf32>
    %148 = arith.subf %144, %147 : vector<8x8xf32>
    %149 = math.exp %148 : vector<8x8xf32>
    %cst_106 = arith.constant dense<0.000000e+00> : vector<8xf32>
    %150 = vector.multi_reduction <add>, %149, %cst_106 [1] : vector<8x8xf32> to vector<8xf32>
    %151 = vector.shape_cast %150 : vector<8xf32> to vector<8x1xf32>
    %152 = tpu.reciprocal %151 : vector<8x1xf32> -> vector<8x1xf32>
    %153 = vector.broadcast %152 : vector<8x1xf32> to vector<8x8xf32>
    %154 = arith.mulf %149, %153 : vector<8x8xf32>
    %c0_107 = arith.constant 0 : index
    %c5_108 = arith.constant 5 : index
    %c0_109 = arith.constant 0 : index
    %c0_110 = arith.constant 0 : index
    %155 = vector.load %arg6[%c0_107, %c5_108, %c0_109, %c0_110] : memref<1x8x8x8xf32, #tpu.memory_space<vmem>>, vector<1x1x8x8xf32>
    %156 = vector.shape_cast %155 : vector<1x1x8x8xf32> to vector<8x8xf32>
    %157 = vector.shape_cast %154 : vector<8x8xf32> to vector<1x1x8x8xf32>
    tpu.vector_store %arg6[%c0_107, %c5_108, %c0_109, %c0_110], %157 {strides = array<i32>} : memref<1x8x8x8xf32, #tpu.memory_space<vmem>>, vector<1x1x8x8xf32>,
    %cst_111 = arith.constant dense<0.000000e+00> : vector<8x4xf32>
    %158 = tpu.matmul %154, %136, %cst_111 {dimension_numbers = #tpu.dot_dimension_numbers<[1], [0], [0], [1], [0, 0, 1, 1], [], []>} : vector<8x8xf32>, vector<8x4xf32>, vector<8x4xf32> -> vector<8x4xf32>
    %c0_112 = arith.constant 0 : index
    %c0_113 = arith.constant 0 : index
    %c20_114 = arith.constant 20 : index
    %159 = vector.load %arg5[%c0_112, %c0_113, %c20_114] : memref<1x8x32xf32, #tpu.memory_space<vmem>>, vector<1x8x4xf32>
    %160 = vector.shape_cast %159 : vector<1x8x4xf32> to vector<8x4xf32>
    %161 = vector.shape_cast %158 : vector<8x4xf32> to vector<1x8x4xf32>
    tpu.vector_store %arg5[%c0_112, %c0_113, %c20_114], %161 {strides = array<i32>} : memref<1x8x32xf32, #tpu.memory_space<vmem>>, vector<1x8x4xf32>,
    %c0_115 = arith.constant 0 : index
    %c0_116 = arith.constant 0 : index
    %c24 = arith.constant 24 : index
    %162 = vector.load %arg4[%c0_115, %c0_116, %c24] : memref<1x8x32xf32, #tpu.memory_space<vmem>>, vector<1x8x4xf32>
    %163 = vector.shape_cast %162 : vector<1x8x4xf32> to vector<8x4xf32>
    %c6 = arith.constant 6 : index
    %c0_117 = arith.constant 0 : index
    %c0_118 = arith.constant 0 : index
    %164 = vector.load %arg2[%c6, %c0_117, %c0_118] : memref<8x8x4xf32, #tpu.memory_space<vmem>>, vector<1x8x4xf32>
    %165 = vector.shape_cast %164 : vector<1x8x4xf32> to vector<8x4xf32>
    %cst_119 = arith.constant 5.000000e-01 : f32
    %166 = vector.broadcast %cst_119 : f32 to vector<8x4xf32>
    %167 = arith.mulf %165, %166 : vector<8x4xf32>
    "tpu.trace_start"() <{level = 10 : i32, message = "qd,kd->qk"}> : () -> ()
    %cst_120 = arith.constant dense<0.000000e+00> : vector<8x8xf32>
    %168 = tpu.matmul %167, %163, %cst_120 {dimension_numbers = #tpu.dot_dimension_numbers<[1], [1], [0], [0], [0, 0, 1, 0], [], []>} : vector<8x4xf32>, vector<8x4xf32>, vector<8x8xf32> -> vector<8x8xf32>
    "tpu.trace_stop"() : () -> ()
    %c6_121 = arith.constant 6 : index
    %c0_122 = arith.constant 0 : index
    %c0_123 = arith.constant 0 : index
    %169 = vector.load %arg3[%c6_121, %c0_122, %c0_123] : memref<8x8x8xf32, #tpu.memory_space<vmem>>, vector<1x8x8xf32>
    %170 = vector.shape_cast %169 : vector<1x8x8xf32> to vector<8x8xf32>
    %171 = arith.addf %168, %170 : vector<8x8xf32>
    %cst_124 = arith.constant dense<0xFF800000> : vector<8xf32>
    %172 = vector.multi_reduction <maximumf>, %171, %cst_124 [1] : vector<8x8xf32> to vector<8xf32>
    %173 = vector.shape_cast %172 : vector<8xf32> to vector<8x1xf32>
    %174 = vector.broadcast %173 : vector<8x1xf32> to vector<8x8xf32>
    %175 = arith.subf %171, %174 : vector<8x8xf32>
    %176 = math.exp %175 : vector<8x8xf32>
    %cst_125 = arith.constant dense<0.000000e+00> : vector<8xf32>
    %177 = vector.multi_reduction <add>, %176, %cst_125 [1] : vector<8x8xf32> to vector<8xf32>
    %178 = vector.shape_cast %177 : vector<8xf32> to vector<8x1xf32>
    %179 = tpu.reciprocal %178 : vector<8x1xf32> -> vector<8x1xf32>
    %180 = vector.broadcast %179 : vector<8x1xf32> to vector<8x8xf32>
    %181 = arith.mulf %176, %180 : vector<8x8xf32>
    %c0_126 = arith.constant 0 : index
    %c6_127 = arith.constant 6 : index
    %c0_128 = arith.constant 0 : index
    %c0_129 = arith.constant 0 : index
    %182 = vector.load %arg6[%c0_126, %c6_127, %c0_128, %c0_129] : memref<1x8x8x8xf32, #tpu.memory_space<vmem>>, vector<1x1x8x8xf32>
    %183 = vector.shape_cast %182 : vector<1x1x8x8xf32> to vector<8x8xf32>
    %184 = vector.shape_cast %181 : vector<8x8xf32> to vector<1x1x8x8xf32>
    tpu.vector_store %arg6[%c0_126, %c6_127, %c0_128, %c0_129], %184 {strides = array<i32>} : memref<1x8x8x8xf32, #tpu.memory_space<vmem>>, vector<1x1x8x8xf32>,
    %cst_130 = arith.constant dense<0.000000e+00> : vector<8x4xf32>
    %185 = tpu.matmul %181, %163, %cst_130 {dimension_numbers = #tpu.dot_dimension_numbers<[1], [0], [0], [1], [0, 0, 1, 1], [], []>} : vector<8x8xf32>, vector<8x4xf32>, vector<8x4xf32> -> vector<8x4xf32>
    %c0_131 = arith.constant 0 : index
    %c0_132 = arith.constant 0 : index
    %c24_133 = arith.constant 24 : index
    %186 = vector.load %arg5[%c0_131, %c0_132, %c24_133] : memref<1x8x32xf32, #tpu.memory_space<vmem>>, vector<1x8x4xf32>
    %187 = vector.shape_cast %186 : vector<1x8x4xf32> to vector<8x4xf32>
    %188 = vector.shape_cast %185 : vector<8x4xf32> to vector<1x8x4xf32>
    tpu.vector_store %arg5[%c0_131, %c0_132, %c24_133], %188 {strides = array<i32>} : memref<1x8x32xf32, #tpu.memory_space<vmem>>, vector<1x8x4xf32>,
    %c0_134 = arith.constant 0 : index
    %c0_135 = arith.constant 0 : index
    %c28 = arith.constant 28 : index
    %189 = vector.load %arg4[%c0_134, %c0_135, %c28] : memref<1x8x32xf32, #tpu.memory_space<vmem>>, vector<1x8x4xf32>
    %190 = vector.shape_cast %189 : vector<1x8x4xf32> to vector<8x4xf32>
    %c7 = arith.constant 7 : index
    %c0_136 = arith.constant 0 : index
    %c0_137 = arith.constant 0 : index
    %191 = vector.load %arg2[%c7, %c0_136, %c0_137] : memref<8x8x4xf32, #tpu.memory_space<vmem>>, vector<1x8x4xf32>
    %192 = vector.shape_cast %191 : vector<1x8x4xf32> to vector<8x4xf32>
    %cst_138 = arith.constant 5.000000e-01 : f32
    %193 = vector.broadcast %cst_138 : f32 to vector<8x4xf32>
    %194 = arith.mulf %192, %193 : vector<8x4xf32>
    "tpu.trace_start"() <{level = 10 : i32, message = "qd,kd->qk"}> : () -> ()
    %cst_139 = arith.constant dense<0.000000e+00> : vector<8x8xf32>
    %195 = tpu.matmul %194, %190, %cst_139 {dimension_numbers = #tpu.dot_dimension_numbers<[1], [1], [0], [0], [0, 0, 1, 0], [], []>} : vector<8x4xf32>, vector<8x4xf32>, vector<8x8xf32> -> vector<8x8xf32>
    "tpu.trace_stop"() : () -> ()
    %c7_140 = arith.constant 7 : index
    %c0_141 = arith.constant 0 : index
    %c0_142 = arith.constant 0 : index
    %196 = vector.load %arg3[%c7_140, %c0_141, %c0_142] : memref<8x8x8xf32, #tpu.memory_space<vmem>>, vector<1x8x8xf32>
    %197 = vector.shape_cast %196 : vector<1x8x8xf32> to vector<8x8xf32>
    %198 = arith.addf %195, %197 : vector<8x8xf32>
    %cst_143 = arith.constant dense<0xFF800000> : vector<8xf32>
    %199 = vector.multi_reduction <maximumf>, %198, %cst_143 [1] : vector<8x8xf32> to vector<8xf32>
    %200 = vector.shape_cast %199 : vector<8xf32> to vector<8x1xf32>
    %201 = vector.broadcast %200 : vector<8x1xf32> to vector<8x8xf32>
    %202 = arith.subf %198, %201 : vector<8x8xf32>
    %203 = math.exp %202 : vector<8x8xf32>
    %cst_144 = arith.constant dense<0.000000e+00> : vector<8xf32>
    %204 = vector.multi_reduction <add>, %203, %cst_144 [1] : vector<8x8xf32> to vector<8xf32>
    %205 = vector.shape_cast %204 : vector<8xf32> to vector<8x1xf32>
    %206 = tpu.reciprocal %205 : vector<8x1xf32> -> vector<8x1xf32>
    %207 = vector.broadcast %206 : vector<8x1xf32> to vector<8x8xf32>
    %208 = arith.mulf %203, %207 : vector<8x8xf32>
    %c0_145 = arith.constant 0 : index
    %c7_146 = arith.constant 7 : index
    %c0_147 = arith.constant 0 : index
    %c0_148 = arith.constant 0 : index
    %209 = vector.load %arg6[%c0_145, %c7_146, %c0_147, %c0_148] : memref<1x8x8x8xf32, #tpu.memory_space<vmem>>, vector<1x1x8x8xf32>
    %210 = vector.shape_cast %209 : vector<1x1x8x8xf32> to vector<8x8xf32>
    %211 = vector.shape_cast %208 : vector<8x8xf32> to vector<1x1x8x8xf32>
    tpu.vector_store %arg6[%c0_145, %c7_146, %c0_147, %c0_148], %211 {strides = array<i32>} : memref<1x8x8x8xf32, #tpu.memory_space<vmem>>, vector<1x1x8x8xf32>,
    %cst_149 = arith.constant dense<0.000000e+00> : vector<8x4xf32>
    %212 = tpu.matmul %208, %190, %cst_149 {dimension_numbers = #tpu.dot_dimension_numbers<[1], [0], [0], [1], [0, 0, 1, 1], [], []>} : vector<8x8xf32>, vector<8x4xf32>, vector<8x4xf32> -> vector<8x4xf32>
    %c0_150 = arith.constant 0 : index
    %c0_151 = arith.constant 0 : index
    %c28_152 = arith.constant 28 : index
    %213 = vector.load %arg5[%c0_150, %c0_151, %c28_152] : memref<1x8x32xf32, #tpu.memory_space<vmem>>, vector<1x8x4xf32>
    %214 = vector.shape_cast %213 : vector<1x8x4xf32> to vector<8x4xf32>
    %215 = vector.shape_cast %212 : vector<8x4xf32> to vector<1x8x4xf32>
    tpu.vector_store %arg5[%c0_150, %c0_151, %c28_152], %215 {strides = array<i32>} : memref<1x8x32xf32, #tpu.memory_space<vmem>>, vector<1x8x4xf32>,
    return
  }
  func.func @transform_0(%arg0: i32, %arg1: i32) -> (i32, i32, i32) {
    %c0_i32 = arith.constant 0 : i32
    %c0_i32_0 = arith.constant 0 : i32
    %c0_i32_1 = arith.constant 0 : i32
    return %c0_i32, %arg1, %c0_i32_0 : i32, i32, i32
  }
  func.func @transform_1(%arg0: i32, %arg1: i32) -> (i32, i32, i32) {
    %c0_i32 = arith.constant 0 : i32
    %c0_i32_0 = arith.constant 0 : i32
    %c0_i32_1 = arith.constant 0 : i32
    return %c0_i32, %arg1, %c0_i32_0 : i32, i32, i32
  }
  func.func @transform_2(%arg0: i32, %arg1: i32) -> (i32, i32, i32) {
    %c0_i32 = arith.constant 0 : i32
    %c0_i32_0 = arith.constant 0 : i32
    %c0_i32_1 = arith.constant 0 : i32
    return %arg0, %c0_i32, %c0_i32_0 : i32, i32, i32
  }
  func.func @transform_3(%arg0: i32, %arg1: i32) -> (i32, i32, i32) {
    %c0_i32 = arith.constant 0 : i32
    %c0_i32_0 = arith.constant 0 : i32
    return %arg0, %arg1, %c0_i32 : i32, i32, i32
  }
  func.func @transform_4(%arg0: i32, %arg1: i32) -> (i32, i32, i32, i32) {
    %c0_i32 = arith.constant 0 : i32
    %c0_i32_0 = arith.constant 0 : i32
    %c0_i32_1 = arith.constant 0 : i32
    return %arg0, %c0_i32, %arg1, %c0_i32_0 : i32, i32, i32, i32
  }
}

</mosaic_0001>

<llo_original>
// kernel: tpu_custom_call.1
$region0: #{tpu_custom_call.1}
  #allocation0 [shape = 'u32[]', space=smem, size = 0x4, offset = 0x4, fixed_abs, tag = 'smem constant byte address 0x4 - core index']
  #allocation1 [shape = 'u32[144,128]{1,0:T(1,128)}', space=vmem, size = 0x12000, scoped, tag = 'internal scratch']
  %s0 = inlined_call_operand.vmem [shape: f32[8,8,4], index: 0, kind: input, shape index: {}]
  %s1 = inlined_call_operand.vmem [shape: f32[8,8,8], index: 1, kind: input, shape index: {}]
  %s2 = inlined_call_operand.vmem [shape: f32[2,8,32], index: 2, kind: input, shape index: {}]
  %s3 = inlined_call_operand.hbm [shape: f32[2,8,32], index: 3, kind: output, shape index: {0}]
  %s4 = inlined_call_operand.hbm [shape: f32[2,8,8,8], index: 4, kind: output, shape index: {1}]
  %5 = xla_tuple %s3, %s4
  %s6 = sld [smem:[#allocation0]]
  $region53: #{tpu_custom_call.1} parent=0
    _
  %s8 = ssub.s32 1, %s6
  %s9 = scalar_select 0, %s8, %s6
  $region1: #{tpu_custom_call.1} parent=0
    #allocation2 [shape = 'u8[8192]{0}', space=vmem, size = 0x2000, scoped, tag = 'output window, operand 0']
    #allocation3 [shape = 's32[2]{0}', space=sflag, size = 0x8, scoped, tag = 'scoped memory for tpu_custom_call.1']
    #allocation4 [shape = 'u8[65536]{0}', space=vmem, size = 0x10000, scoped, tag = 'output window, operand 1']
    #allocation5 [shape = 's32[2]{0}', space=sflag, size = 0x8, scoped, tag = 'scoped memory for tpu_custom_call.1']
    %10 = vsyncpa [#allocation3], 0
    %s11 = scalar_lea.sflag [#allocation3], 1
    %12 = vsyncpa %s11, 0
    %13 = vsyncpa [#allocation5], 0
    %s14 = scalar_lea.sflag [#allocation5], 1
    %15 = vsyncpa %s14, 0
    loop: start=0, step=1, limit=4
    $region2: #{tpu_custom_call.1} parent=1 // loop_pre_header
      _
    $region3: #{tpu_custom_call.1} parent=1 // loop_header
      %s17 = sphi 0, %s21
      %p18 = scmp.ge.s32.totalorder %s17, 4
      %s24 = sphi 0, %s36
      %s25 = sphi 0, %s32
      %s26 = sphi 0, %s24
      %s27 = sphi 0, %s25
      %s28 = sphi 0, %s26
      %s29 = sphi 0, %s27
      %s39 = sphi 0, %s41
      %s42 = sphi 0, %s39
      %s43 = sphi 0, %s42
      %s59 = sphi 0, %s43
      %s65 = sphi 0, %s67
      %s68 = sphi 0, %s65
      %s69 = sphi 0, %s68
      %s85 = sphi 0, %s69
      %s91 = sphi 0, %s93
      %s94 = sphi 0, %s91
      %s95 = sphi 0, %s94
      %s111 = sphi 0, %s95
      %s119 = sphi 0, %s121
      %s122 = sphi 0, %s119
      %s123 = sphi 0, %s122
      %s139 = sphi 0, %s123
      %s147 = sphi 0, %s149
      %s150 = sphi 0, %s147
      %s151 = sphi 0, %s150
      %s167 = sphi 0, %s151
    $region4: #{tpu_custom_call.1} parent=1 // loop_header_branch
      %20 = sbr.rel (%p18) target = $region8
    $region5: #{tpu_custom_call.1} parent=1 // loop_body
      %s22 = ssub.s32 %s17, 1
      %s23 = ssub.s32 %s17, 2
      %s30 = sadd.s32 1, %s25
      %p31 = scmp.ge.s32.totalorder %s30, 1
      %s32 = scalar_select %p31, 0, %s30
      %s33 = sadd.s32 1, %s24
      %s34 = scalar_select %p31, %s33, %s24
      %p35 = scmp.ge.s32.totalorder %s34, 2
      %s36 = scalar_select %p35, 0, %s34
      %s37 = ssub.s32 %s25, %s32
      %p38 = scmp.eq.s32.totalorder %s37, 0
      %s40 = sadd.s32 %s39, 1
      %s41 = scalar_select %p38, %s39, %s40
      %p44 = pneg %p38
      %p45 = scmp.eq.s32.totalorder %s17, 1
      %p46 = por %p44, %p45
      %p47 = scmp.ne.s32.totalorder %s39, %s42
      %p48 = scmp.eq.s32.totalorder %s17, 0
      %p49 = por %p47, %p48
      %p50 = scmp.ne.s32.totalorder %s39, %s42
      %p51 = scmp.eq.s32.totalorder %s22, 1
      %p52 = por %p50, %p51
      %p53 = scmp.ne.s32.totalorder %s42, %s43
      %p54 = scmp.eq.s32.totalorder %s22, 0
      %p55 = por %p53, %p54
      %p56 = scmp.ne.s32.totalorder %s42, %s43
      %p57 = scmp.eq.s32.totalorder %s23, 1
      %p58 = por %p56, %p57
      %p60 = scmp.ne.s32.totalorder %s43, %s59
      %p61 = scmp.eq.s32.totalorder %s23, 0
      %p62 = por %p60, %p61
      %s63 = ssub.s32 %s25, %s32
      %p64 = scmp.eq.s32.totalorder %s63, 0
      %s66 = sadd.s32 %s65, 1
      %s67 = scalar_select %p64, %s65, %s66
      %p70 = pneg %p64
      %p71 = scmp.eq.s32.totalorder %s17, 1
      %p72 = por %p70, %p71
      %p73 = scmp.ne.s32.totalorder %s65, %s68
      %p74 = scmp.eq.s32.totalorder %s17, 0
      %p75 = por %p73, %p74
      %p76 = scmp.ne.s32.totalorder %s65, %s68
      %p77 = scmp.eq.s32.totalorder %s22, 1
      %p78 = por %p76, %p77
      %p79 = scmp.ne.s32.totalorder %s68, %s69
      %p80 = scmp.eq.s32.totalorder %s22, 0
      %p81 = por %p79, %p80
      %p82 = scmp.ne.s32.totalorder %s68, %s69
      %p83 = scmp.eq.s32.totalorder %s23, 1
      %p84 = por %p82, %p83
      %p86 = scmp.ne.s32.totalorder %s69, %s85
      %p87 = scmp.eq.s32.totalorder %s23, 0
      %p88 = por %p86, %p87
      %s89 = ssub.s32 %s24, %s36
      %p90 = scmp.eq.s32.totalorder %s89, 0
      %s92 = sadd.s32 %s91, 1
      %s93 = scalar_select %p90, %s91, %s92
      %p96 = pneg %p90
      %p97 = scmp.eq.s32.totalorder %s17, 1
      %p98 = por %p96, %p97
      %p99 = scmp.ne.s32.totalorder %s91, %s94
      %p100 = scmp.eq.s32.totalorder %s17, 0
      %p101 = por %p99, %p100
      %p102 = scmp.ne.s32.totalorder %s91, %s94
      %p103 = scmp.eq.s32.totalorder %s22, 1
      %p104 = por %p102, %p103
      %p105 = scmp.ne.s32.totalorder %s94, %s95
      %p106 = scmp.eq.s32.totalorder %s22, 0
      %p107 = por %p105, %p106
      %p108 = scmp.ne.s32.totalorder %s94, %s95
      %p109 = scmp.eq.s32.totalorder %s23, 1
      %p110 = por %p108, %p109
      %p112 = scmp.ne.s32.totalorder %s95, %s111
      %p113 = scmp.eq.s32.totalorder %s23, 0
      %p114 = por %p112, %p113
      %s115 = ssub.s32 %s24, %s36
      %s116 = ssub.s32 %s25, %s32
      %s117 = sor.u32 %s115, %s116
      %p118 = scmp.eq.s32.totalorder %s117, 0
      %s120 = sadd.s32 %s119, 1
      %s121 = scalar_select %p118, %s119, %s120
      %p124 = pneg %p118
      %p125 = scmp.eq.s32.totalorder %s17, 1
      %p126 = por %p124, %p125
      %p127 = scmp.ne.s32.totalorder %s119, %s122
      %p128 = scmp.eq.s32.totalorder %s17, 0
      %p129 = por %p127, %p128
      %p130 = scmp.ne.s32.totalorder %s119, %s122
      %p131 = scmp.eq.s32.totalorder %s22, 1
      %p132 = por %p130, %p131
      %p133 = scmp.ne.s32.totalorder %s122, %s123
      %p134 = scmp.eq.s32.totalorder %s22, 0
      %p135 = por %p133, %p134
      %p136 = scmp.ne.s32.totalorder %s122, %s123
      %p137 = scmp.eq.s32.totalorder %s23, 1
      %p138 = por %p136, %p137
      %p140 = scmp.ne.s32.totalorder %s123, %s139
      %p141 = scmp.eq.s32.totalorder %s23, 0
      %p142 = por %p140, %p141
      %s143 = ssub.s32 %s24, %s36
      %s144 = ssub.s32 %s25, %s32
      %s145 = sor.u32 %s143, %s144
      %p146 = scmp.eq.s32.totalorder %s145, 0
      %s148 = sadd.s32 %s147, 1
      %s149 = scalar_select %p146, %s147, %s148
      %p152 = pneg %p146
      %p153 = scmp.eq.s32.totalorder %s17, 1
      %p154 = por %p152, %p153
      %p155 = scmp.ne.s32.totalorder %s147, %s150
      %p156 = scmp.eq.s32.totalorder %s17, 0
      %p157 = por %p155, %p156
      %p158 = scmp.ne.s32.totalorder %s147, %s150
      %p159 = scmp.eq.s32.totalorder %s22, 1
      %p160 = por %p158, %p159
      %p161 = scmp.ne.s32.totalorder %s150, %s151
      %p162 = scmp.eq.s32.totalorder %s22, 0
      %p163 = por %p161, %p162
      %p164 = scmp.ne.s32.totalorder %s150, %s151
      %p165 = scmp.eq.s32.totalorder %s23, 1
      %p166 = por %p164, %p165
      %p168 = scmp.ne.s32.totalorder %s151, %s167
      %p169 = scmp.eq.s32.totalorder %s23, 0
      %p170 = por %p168, %p169
      %p171 = scmp.le.s32.totalorder 1, %s17
      %p172 = scmp.lt.s32.totalorder %s17, 3
      %p173 = pnand %p171, %p172
      %p174 = pneg %p173
      // Predicated region
      $region9: #{tpu_custom_call.1} parent=5 // pred_check
        _
      $region10: #{tpu_custom_call.1} parent=5 // pred_check_branch
        %176 = sbr.rel (%p173) target = $region12
      $region11: #{tpu_custom_call.1} parent=5 // pred_region
        %s177 = ssub.s32 %s17, 1
        // Predicated region
        $region13: #{tpu_custom_call.1} parent=11 // pred_check
          %p178 = pneg %p55
        $region14: #{tpu_custom_call.1} parent=11 // pred_check_branch
          %180 = sbr.rel (%p178) target = $region16
        $region15: #{tpu_custom_call.1} parent=11 // pred_region
          %p181 = scmp.lt.s32.totalorder %s27, 0
          %s182 = scalar_select %p181, %s27, 0
          %s183 = smul.addr %s182, 8
          %s184 = scalar_lea.vmem %s0, %s183
        $region16: #{tpu_custom_call.1} parent=11 // pred_fallthru
          _
        // Predicated region
        $region17: #{tpu_custom_call.1} parent=11 // pred_check
          %p185 = pneg %p81
        $region18: #{tpu_custom_call.1} parent=11 // pred_check_branch
          %187 = sbr.rel (%p185) target = $region20
        $region19: #{tpu_custom_call.1} parent=11 // pred_region
          %p188 = scmp.lt.s32.totalorder %s27, 0
          %s189 = scalar_select %p188, %s27, 0
          %s190 = smul.addr %s189, 8
          %s191 = scalar_lea.vmem %s1, %s190
        $region20: #{tpu_custom_call.1} parent=11 // pred_fallthru
          _
      $region12: #{tpu_custom_call.1} parent=5 // pred_fallthru
        _
      %p192 = scmp.lt.s32.totalorder %s17, 2
      // Predicated region
      $region21: #{tpu_custom_call.1} parent=5 // pred_check
        %p193 = pneg %p192
      $region22: #{tpu_custom_call.1} parent=5 // pred_check_branch
        %195 = sbr.rel (%p193) target = $region24
      $region23: #{tpu_custom_call.1} parent=5 // pred_region
        // Predicated region
        $region25: #{tpu_custom_call.1} parent=23 // pred_check
          %p196 = pneg %p101
        $region26: #{tpu_custom_call.1} parent=23 // pred_check_branch
          %198 = sbr.rel (%p196) target = $region28
        $region27: #{tpu_custom_call.1} parent=23 // pred_region
          %p199 = scmp.lt.s32.totalorder %s24, 1
          %s200 = scalar_select %p199, %s24, 1
          %s201 = smul.addr %s200, 8
          %s202 = scalar_lea.vmem %s2, %s201
        $region28: #{tpu_custom_call.1} parent=23 // pred_fallthru
          _
      $region24: #{tpu_custom_call.1} parent=5 // pred_fallthru
        _
      %p203 = scmp.le.s32.totalorder 1, %s17
      %p204 = scmp.lt.s32.totalorder %s17, 3
      %p205 = pnand %p203, %p204
      %p206 = pneg %p205
      // Predicated region
      $region29: #{tpu_custom_call.1} parent=5 // pred_check
        _
      $region30: #{tpu_custom_call.1} parent=5 // pred_check_branch
        %208 = sbr.rel (%p205) target = $region32
      $region31: #{tpu_custom_call.1} parent=5 // pred_region
        %s209 = ssub.s32 %s17, 1
        %p210 = scmp.lt.s32.totalorder %s27, 0
        %s211 = scalar_select %p210, %s27, 0
        %s212 = smul.addr %s211, 8
        %s213 = scalar_lea.vmem %s0, %s212
        %p214 = pneg %p55
        %p215 = pneg %p52
        %p216 = scmp.lt.s32.totalorder %s27, 0
        %s217 = scalar_select %p216, %s27, 0
        %s218 = smul.addr %s217, 8
        %s219 = scalar_lea.vmem %s1, %s218
        %p220 = pneg %p81
        %p221 = pneg %p78
        %p222 = scmp.lt.s32.totalorder %s26, 1
        %s223 = scalar_select %p222, %s26, 1
        %s224 = smul.addr %s223, 8
        %s225 = scalar_lea.vmem %s2, %s224
        %p226 = pneg %p107
        %p227 = pneg %p104
        %p228 = pneg %p135
        %p229 = pneg %p132
        %s230 = sand.u32 %s122, 1
        %s231 = scalar_lea.sflag [#allocation3], %s230
        %s232 = sand.u32 %s122, 1
        %s233 = smul.addr %s232, 8
        %s234 = scalar_lea.vmem [#allocation2], %s233
        %p235 = pneg %p163
        %p236 = pneg %p160
        %s237 = sand.u32 %s150, 1
        %s238 = scalar_lea.sflag [#allocation5], %s237
        %s239 = sand.u32 %s150, 1
        %s240 = smul.addr %s239, 64
        %s241 = scalar_lea.vmem [#allocation4], %s240
        %p242 = scmp.lt.s32.totalorder %s27, 0
        %s243 = scalar_select %p242, %s27, 0
        %s244 = smul.addr %s243, 8
        %s245 = scalar_lea.vmem %s0, %s244
        %p246 = scmp.lt.s32.totalorder %s27, 0
        %s247 = scalar_select %p246, %s27, 0
        %s248 = smul.addr %s247, 8
        %s249 = scalar_lea.vmem %s1, %s248
        %p250 = scmp.lt.s32.totalorder %s26, 1
        %s251 = scalar_select %p250, %s26, 1
        %s252 = smul.addr %s251, 8
        %s253 = scalar_lea.vmem %s2, %s252
        %v254 = vld [vmem:[%s253] sm:$0xff]
        %v255 = vld [vmem:[%s245] sm:$0xff]
        %v256 = vmul.f32 %v255, 0.5
        %v257 = vld [vmem:[%s249] sm:$0xff]
        %vm258 = vcmask 31744
        %v260 = vsel %vm258, %v256, 0
        %v263 = vsel %vm258, %v254, 0
        %265 = vmatprep.subr.mxu0 0.0
        %266 = vmatpush1.xpose.msra.mxu0 %v263
        %267 = vmatprep.subr.mxu0 0.0
        %268 = vmatpush1.xpose.msra.mxu0 0.0
        %269 = vmatprep.subr.mxu0 0.0
        %270 = vmatpush1.xpose.msra.mxu0 0.0
        %271 = vmatprep.subr.mxu0 0.0
        %272 = vmatpush1.xpose.msra.mxu0 0.0
        %273 = vmatprep.subr.mxu0 0.0
        %274 = vmatpush1.xpose.msra.mxu0 0.0
        %275 = vmatprep.subr.mxu0 0.0
        %276 = vmatpush1.xpose.msra.mxu0 0.0
        %277 = vmatprep.subr.mxu0 0.0
        %278 = vmatpush1.xpose.msra.mxu0 0.0
        %279 = vmatprep.subr.mxu0 0.0
        %280 = vmatpush1.xpose.msra.mxu0 0.0
        %281 = vmatprep.subr.mxu0 0.0
        %282 = vmatpush1.xpose.msra.mxu0 0.0
        %283 = vmatprep.subr.mxu0 0.0
        %284 = vmatpush1.xpose.msra.mxu0 0.0
        %285 = vmatprep.subr.mxu0 0.0
        %286 = vmatpush1.xpose.msra.mxu0 0.0
        %287 = vmatprep.subr.mxu0 0.0
        %288 = vmatpush1.xpose.msra.mxu0 0.0
        %289 = vmatprep.subr.mxu0 0.0
        %290 = vmatpush1.xpose.msra.mxu0 0.0
        %291 = vmatprep.subr.mxu0 0.0
        %292 = vmatpush1.xpose.msra.mxu0 0.0
        %293 = vmatprep.subr.mxu0 0.0
        %294 = vmatpush1.xpose.msra.mxu0 0.0
        %295 = vmatprep.subr.mxu0 0.0
        %296 = vmatpush1.xpose.msra.mxu0 0.0
        %297 = vmatprep.subr.mxu0 0.0
        %298 = vmatpush1.xpose.msra.mxu0 0.0
        %299 = vmatprep.subr.mxu0 0.0
        %300 = vmatpush1.xpose.msra.mxu0 0.0
        %301 = vmatprep.subr.mxu0 0.0
        %302 = vmatpush1.xpose.msra.mxu0 0.0
        %303 = vmatprep.subr.mxu0 0.0
        %304 = vmatpush1.xpose.msra.mxu0 0.0
        %305 = vmatprep.subr.mxu0 0.0
        %306 = vmatpush1.xpose.msra.mxu0 0.0
        %307 = vmatprep.subr.mxu0 0.0
        %308 = vmatpush1.xpose.msra.mxu0 0.0
        %309 = vmatprep.subr.mxu0 0.0
        %310 = vmatpush1.xpose.msra.mxu0 0.0
        %311 = vmatprep.subr.mxu0 0.0
        %312 = vmatpush1.xpose.msra.mxu0 0.0
        %313 = vmatprep.subr.mxu0 0.0
        %314 = vmatpush1.xpose.msra.mxu0 0.0
        %315 = vmatprep.subr.mxu0 0.0
        %316 = vmatpush1.xpose.msra.mxu0 0.0
        %317 = vmatprep.subr.mxu0 0.0
        %318 = vmatpush1.xpose.msra.mxu0 0.0
        %319 = vmatprep.subr.mxu0 0.0
        %320 = vmatpush1.xpose.msra.mxu0 0.0
        %321 = vmatprep.subr.mxu0 0.0
        %322 = vmatpush1.xpose.msra.mxu0 0.0
        %323 = vmatprep.subr.mxu0 0.0
        %324 = vmatpush1.xpose.msra.mxu0 0.0
        %325 = vmatprep.subr.mxu0 0.0
        %326 = vmatpush1.xpose.msra.mxu0 0.0
        %327 = vmatprep.subr.mxu0 0.0
        %328 = vmatpush1.xpose.msra.mxu0 0.0
        %329 = vmatprep.mubr.f32.mxu0 0.0
        %330 = vmatmul.mubr.f32.gmra.mrb[0].mxu0 %v260
        %v331 = vpop.f32.mrb[0].mxu0
        %v332 = vadd.f32 %v257, %v331
        %v333 = vpop.f32.mrb[0].mxu0
        %334 = vdwg.mxu0
        %vm335 = vcmask 64512
        %v336 = vsel %vm335, %v332, -inf
        %337 = vmax.xlane.f32.xlu0 %v336
        %v338 = vpop.xlane.xlu0 %337
        %v339 = vsub.f32 %v332, %v338
        %v340 = vmul.f32 %v339, 1.442695
        %v341 = vpow.pop %v340
        %v342 = vsel %vm335, %v341, 0.0
        %343 = vadd.xlane.f32.xlu0 %v342
        %v344 = vpop.xlane.xlu0 %343
        %v345 = vrcp.pop %v344
        %v346 = vmul.f32 %v341, %v345
        %347 = vst.msk [vmem:[%s241] sm:$0xff] %vm335, %v346
        %v349 = vsel %vm335, %v346, 0
        %351 = vmatprep.subr.mxu0 0.0
        %352 = vmatpush1.msra.mxu0 %v254
        %353 = vmatprep.subr.mxu0 0.0
        %354 = vmatpush1.msra.mxu0 0.0
        %355 = vmatprep.subr.mxu0 0.0
        %356 = vmatpush1.msra.mxu0 0.0
        %357 = vmatprep.subr.mxu0 0.0
        %358 = vmatpush1.msra.mxu0 0.0
        %359 = vmatprep.subr.mxu0 0.0
        %360 = vmatpush1.msra.mxu0 0.0
        %361 = vmatprep.subr.mxu0 0.0
        %362 = vmatpush1.msra.mxu0 0.0
        %363 = vmatprep.subr.mxu0 0.0
        %364 = vmatpush1.msra.mxu0 0.0
        %365 = vmatprep.subr.mxu0 0.0
        %366 = vmatpush1.msra.mxu0 0.0
        %367 = vmatprep.subr.mxu0 0.0
        %368 = vmatpush1.msra.mxu0 0.0
        %369 = vmatprep.subr.mxu0 0.0
        %370 = vmatpush1.msra.mxu0 0.0
        %371 = vmatprep.subr.mxu0 0.0
        %372 = vmatpush1.msra.mxu0 0.0
        %373 = vmatprep.subr.mxu0 0.0
        %374 = vmatpush1.msra.mxu0 0.0
        %375 = vmatprep.subr.mxu0 0.0
        %376 = vmatpush1.msra.mxu0 0.0
        %377 = vmatprep.subr.mxu0 0.0
        %378 = vmatpush1.msra.mxu0 0.0
        %379 = vmatprep.subr.mxu0 0.0
        %380 = vmatpush1.msra.mxu0 0.0
        %381 = vmatprep.subr.mxu0 0.0
        %382 = vmatpush1.msra.mxu0 0.0
        %383 = vmatprep.subr.mxu0 0.0
        %384 = vmatpush1.msra.mxu0 0.0
        %385 = vmatprep.subr.mxu0 0.0
        %386 = vmatpush1.msra.mxu0 0.0
        %387 = vmatprep.subr.mxu0 0.0
        %388 = vmatpush1.msra.mxu0 0.0
        %389 = vmatprep.subr.mxu0 0.0
        %390 = vmatpush1.msra.mxu0 0.0
        %391 = vmatprep.subr.mxu0 0.0
        %392 = vmatpush1.msra.mxu0 0.0
        %393 = vmatprep.subr.mxu0 0.0
        %394 = vmatpush1.msra.mxu0 0.0
        %395 = vmatprep.subr.mxu0 0.0
        %396 = vmatpush1.msra.mxu0 0.0
        %397 = vmatprep.subr.mxu0 0.0
        %398 = vmatpush1.msra.mxu0 0.0
        %399 = vmatprep.subr.mxu0 0.0
        %400 = vmatpush1.msra.mxu0 0.0
        %401 = vmatprep.subr.mxu0 0.0
        %402 = vmatpush1.msra.mxu0 0.0
        %403 = vmatprep.subr.mxu0 0.0
        %404 = vmatpush1.msra.mxu0 0.0
        %405 = vmatprep.subr.mxu0 0.0
        %406 = vmatpush1.msra.mxu0 0.0
        %407 = vmatprep.subr.mxu0 0.0
        %408 = vmatpush1.msra.mxu0 0.0
        %409 = vmatprep.subr.mxu0 0.0
        %410 = vmatpush1.msra.mxu0 0.0
        %411 = vmatprep.subr.mxu0 0.0
        %412 = vmatpush1.msra.mxu0 0.0
        %413 = vmatprep.subr.mxu0 0.0
        %414 = vmatpush1.msra.mxu0 0.0
        %415 = vmatprep.mubr.f32.mxu0 0.0
        %416 = vmatmul.mubr.f32.gmra.mrb[0].mxu0 %v349
        %v417 = vpop.f32.mrb[0].mxu0
        %v418 = vadd.f32 0.0, %v417
        %v419 = vpop.f32.mrb[0].mxu0
        %420 = vdwg.mxu0
        %421 = vst.msk [vmem:[%s234] sm:$0xff] %vm258, %v418
        %v422 = vld [vmem:[%s253] sm:$0xff]
        %s423 = scalar_lea.vmem %s245, 8
        %v424 = vld [vmem:[%s423] sm:$0xff]
        %v425 = vmul.f32 %v424, 0.5
        %s426 = scalar_lea.vmem %s249, 8
        %v427 = vld [vmem:[%s426] sm:$0xff]
        %429 = vrot.lane.b32.xlu0 %v422, 124
        %v430 = vpop.permute.xlu0 %429
        %v432 = vsel %vm258, %v425, 0
        %v434 = vsel %vm258, %v430, 0
        %436 = vmatprep.subr.mxu0 0.0
        %437 = vmatpush1.xpose.msra.mxu0 %v434
        %438 = vmatprep.subr.mxu0 0.0
        %439 = vmatpush1.xpose.msra.mxu0 0.0
        %440 = vmatprep.subr.mxu0 0.0
        %441 = vmatpush1.xpose.msra.mxu0 0.0
        %442 = vmatprep.subr.mxu0 0.0
        %443 = vmatpush1.xpose.msra.mxu0 0.0
        %444 = vmatprep.subr.mxu0 0.0
        %445 = vmatpush1.xpose.msra.mxu0 0.0
        %446 = vmatprep.subr.mxu0 0.0
        %447 = vmatpush1.xpose.msra.mxu0 0.0
        %448 = vmatprep.subr.mxu0 0.0
        %449 = vmatpush1.xpose.msra.mxu0 0.0
        %450 = vmatprep.subr.mxu0 0.0
        %451 = vmatpush1.xpose.msra.mxu0 0.0
        %452 = vmatprep.subr.mxu0 0.0
        %453 = vmatpush1.xpose.msra.mxu0 0.0
        %454 = vmatprep.subr.mxu0 0.0
        %455 = vmatpush1.xpose.msra.mxu0 0.0
        %456 = vmatprep.subr.mxu0 0.0
        %457 = vmatpush1.xpose.msra.mxu0 0.0
        %458 = vmatprep.subr.mxu0 0.0
        %459 = vmatpush1.xpose.msra.mxu0 0.0
        %460 = vmatprep.subr.mxu0 0.0
        %461 = vmatpush1.xpose.msra.mxu0 0.0
        %462 = vmatprep.subr.mxu0 0.0
        %463 = vmatpush1.xpose.msra.mxu0 0.0
        %464 = vmatprep.subr.mxu0 0.0
        %465 = vmatpush1.xpose.msra.mxu0 0.0
        %466 = vmatprep.subr.mxu0 0.0
        %467 = vmatpush1.xpose.msra.mxu0 0.0
        %468 = vmatprep.subr.mxu0 0.0
        %469 = vmatpush1.xpose.msra.mxu0 0.0
        %470 = vmatprep.subr.mxu0 0.0
        %471 = vmatpush1.xpose.msra.mxu0 0.0
        %472 = vmatprep.subr.mxu0 0.0
        %473 = vmatpush1.xpose.msra.mxu0 0.0
        %474 = vmatprep.subr.mxu0 0.0
        %475 = vmatpush1.xpose.msra.mxu0 0.0
        %476 = vmatprep.subr.mxu0 0.0
        %477 = vmatpush1.xpose.msra.mxu0 0.0
        %478 = vmatprep.subr.mxu0 0.0
        %479 = vmatpush1.xpose.msra.mxu0 0.0
        %480 = vmatprep.subr.mxu0 0.0
        %481 = vmatpush1.xpose.msra.mxu0 0.0
        %482 = vmatprep.subr.mxu0 0.0
        %483 = vmatpush1.xpose.msra.mxu0 0.0
        %484 = vmatprep.subr.mxu0 0.0
        %485 = vmatpush1.xpose.msra.mxu0 0.0
        %486 = vmatprep.subr.mxu0 0.0
        %487 = vmatpush1.xpose.msra.mxu0 0.0
        %488 = vmatprep.subr.mxu0 0.0
        %489 = vmatpush1.xpose.msra.mxu0 0.0
        %490 = vmatprep.subr.mxu0 0.0
        %491 = vmatpush1.xpose.msra.mxu0 0.0
        %492 = vmatprep.subr.mxu0 0.0
        %493 = vmatpush1.xpose.msra.mxu0 0.0
        %494 = vmatprep.subr.mxu0 0.0
        %495 = vmatpush1.xpose.msra.mxu0 0.0
        %496 = vmatprep.subr.mxu0 0.0
        %497 = vmatpush1.xpose.msra.mxu0 0.0
        %498 = vmatprep.subr.mxu0 0.0
        %499 = vmatpush1.xpose.msra.mxu0 0.0
        %500 = vmatprep.mubr.f32.mxu0 0.0
        %501 = vmatmul.mubr.f32.gmra.mrb[0].mxu0 %v432
        %v502 = vpop.f32.mrb[0].mxu0
        %v503 = vadd.f32 %v427, %v502
        %v504 = vpop.f32.mrb[0].mxu0
        %505 = vdwg.mxu0
        %v506 = vsel %vm335, %v503, -inf
        %507 = vmax.xlane.f32.xlu0 %v506
        %v508 = vpop.xlane.xlu0 %507
        %v509 = vsub.f32 %v503, %v508
        %v510 = vmul.f32 %v509, 1.442695
        %v511 = vpow.pop %v510
        %v512 = vsel %vm335, %v511, 0.0
        %513 = vadd.xlane.f32.xlu0 %v512
        %v514 = vpop.xlane.xlu0 %513
        %v515 = vrcp.pop %v514
        %v516 = vmul.f32 %v511, %v515
        %s517 = scalar_lea.vmem %s241, 8 [#allocation4]
        %518 = vst.msk [vmem:[%s517] sm:$0xff] %vm335, %v516
        %v521 = vsel %vm335, %v516, 0
        %523 = vmatprep.subr.mxu0 0.0
        %524 = vmatpush1.msra.mxu0 %v430
        %525 = vmatprep.subr.mxu0 0.0
        %526 = vmatpush1.msra.mxu0 0.0
        %527 = vmatprep.subr.mxu0 0.0
        %528 = vmatpush1.msra.mxu0 0.0
        %529 = vmatprep.subr.mxu0 0.0
        %530 = vmatpush1.msra.mxu0 0.0
        %531 = vmatprep.subr.mxu0 0.0
        %532 = vmatpush1.msra.mxu0 0.0
        %533 = vmatprep.subr.mxu0 0.0
        %534 = vmatpush1.msra.mxu0 0.0
        %535 = vmatprep.subr.mxu0 0.0
        %536 = vmatpush1.msra.mxu0 0.0
        %537 = vmatprep.subr.mxu0 0.0
        %538 = vmatpush1.msra.mxu0 0.0
        %539 = vmatprep.subr.mxu0 0.0
        %540 = vmatpush1.msra.mxu0 0.0
        %541 = vmatprep.subr.mxu0 0.0
        %542 = vmatpush1.msra.mxu0 0.0
        %543 = vmatprep.subr.mxu0 0.0
        %544 = vmatpush1.msra.mxu0 0.0
        %545 = vmatprep.subr.mxu0 0.0
        %546 = vmatpush1.msra.mxu0 0.0
        %547 = vmatprep.subr.mxu0 0.0
        %548 = vmatpush1.msra.mxu0 0.0
        %549 = vmatprep.subr.mxu0 0.0
        %550 = vmatpush1.msra.mxu0 0.0
        %551 = vmatprep.subr.mxu0 0.0
        %552 = vmatpush1.msra.mxu0 0.0
        %553 = vmatprep.subr.mxu0 0.0
        %554 = vmatpush1.msra.mxu0 0.0
        %555 = vmatprep.subr.mxu0 0.0
        %556 = vmatpush1.msra.mxu0 0.0
        %557 = vmatprep.subr.mxu0 0.0
        %558 = vmatpush1.msra.mxu0 0.0
        %559 = vmatprep.subr.mxu0 0.0
        %560 = vmatpush1.msra.mxu0 0.0
        %561 = vmatprep.subr.mxu0 0.0
        %562 = vmatpush1.msra.mxu0 0.0
        %563 = vmatprep.subr.mxu0 0.0
        %564 = vmatpush1.msra.mxu0 0.0
        %565 = vmatprep.subr.mxu0 0.0
        %566 = vmatpush1.msra.mxu0 0.0
        %567 = vmatprep.subr.mxu0 0.0
        %568 = vmatpush1.msra.mxu0 0.0
        %569 = vmatprep.subr.mxu0 0.0
        %570 = vmatpush1.msra.mxu0 0.0
        %571 = vmatprep.subr.mxu0 0.0
        %572 = vmatpush1.msra.mxu0 0.0
        %573 = vmatprep.subr.mxu0 0.0
        %574 = vmatpush1.msra.mxu0 0.0
        %575 = vmatprep.subr.mxu0 0.0
        %576 = vmatpush1.msra.mxu0 0.0
        %577 = vmatprep.subr.mxu0 0.0
        %578 = vmatpush1.msra.mxu0 0.0
        %579 = vmatprep.subr.mxu0 0.0
        %580 = vmatpush1.msra.mxu0 0.0
        %581 = vmatprep.subr.mxu0 0.0
        %582 = vmatpush1.msra.mxu0 0.0
        %583 = vmatprep.subr.mxu0 0.0
        %584 = vmatpush1.msra.mxu0 0.0
        %585 = vmatprep.subr.mxu0 0.0
        %586 = vmatpush1.msra.mxu0 0.0
        %587 = vmatprep.mubr.f32.mxu0 0.0
        %588 = vmatmul.mubr.f32.gmra.mrb[0].mxu0 %v521
        %v589 = vpop.f32.mrb[0].mxu0
        %v590 = vadd.f32 0.0, %v589
        %v591 = vpop.f32.mrb[0].mxu0
        %592 = vdwg.mxu0
        %594 = vrot.lane.b32.xlu0 %v590, 4
        %v595 = vpop.permute.xlu0 %594
        %vm597 = vcmask 64544
        %598 = vst.msk [vmem:[%s234] sm:$0xff] %vm597, %v595
        %v599 = vld [vmem:[%s253] sm:$0xff]
        %s600 = scalar_lea.vmem %s245, 16
        %v601 = vld [vmem:[%s600] sm:$0xff]
        %v602 = vmul.f32 %v601, 0.5
        %s603 = scalar_lea.vmem %s249, 16
        %v604 = vld [vmem:[%s603] sm:$0xff]
        %606 = vrot.lane.b32.xlu0 %v599, 120
        %v607 = vpop.permute.xlu0 %606
        %v609 = vsel %vm258, %v602, 0
        %v611 = vsel %vm258, %v607, 0
        %613 = vmatprep.subr.mxu0 0.0
        %614 = vmatpush1.xpose.msra.mxu0 %v611
        %615 = vmatprep.subr.mxu0 0.0
        %616 = vmatpush1.xpose.msra.mxu0 0.0
        %617 = vmatprep.subr.mxu0 0.0
        %618 = vmatpush1.xpose.msra.mxu0 0.0
        %619 = vmatprep.subr.mxu0 0.0
        %620 = vmatpush1.xpose.msra.mxu0 0.0
        %621 = vmatprep.subr.mxu0 0.0
        %622 = vmatpush1.xpose.msra.mxu0 0.0
        %623 = vmatprep.subr.mxu0 0.0
        %624 = vmatpush1.xpose.msra.mxu0 0.0
        %625 = vmatprep.subr.mxu0 0.0
        %626 = vmatpush1.xpose.msra.mxu0 0.0
        %627 = vmatprep.subr.mxu0 0.0
        %628 = vmatpush1.xpose.msra.mxu0 0.0
        %629 = vmatprep.subr.mxu0 0.0
        %630 = vmatpush1.xpose.msra.mxu0 0.0
        %631 = vmatprep.subr.mxu0 0.0
        %632 = vmatpush1.xpose.msra.mxu0 0.0
        %633 = vmatprep.subr.mxu0 0.0
        %634 = vmatpush1.xpose.msra.mxu0 0.0
        %635 = vmatprep.subr.mxu0 0.0
        %636 = vmatpush1.xpose.msra.mxu0 0.0
        %637 = vmatprep.subr.mxu0 0.0
        %638 = vmatpush1.xpose.msra.mxu0 0.0
        %639 = vmatprep.subr.mxu0 0.0
        %640 = vmatpush1.xpose.msra.mxu0 0.0
        %641 = vmatprep.subr.mxu0 0.0
        %642 = vmatpush1.xpose.msra.mxu0 0.0
        %643 = vmatprep.subr.mxu0 0.0
        %644 = vmatpush1.xpose.msra.mxu0 0.0
        %645 = vmatprep.subr.mxu0 0.0
        %646 = vmatpush1.xpose.msra.mxu0 0.0
        %647 = vmatprep.subr.mxu0 0.0
        %648 = vmatpush1.xpose.msra.mxu0 0.0
        %649 = vmatprep.subr.mxu0 0.0
        %650 = vmatpush1.xpose.msra.mxu0 0.0
        %651 = vmatprep.subr.mxu0 0.0
        %652 = vmatpush1.xpose.msra.mxu0 0.0
        %653 = vmatprep.subr.mxu0 0.0
        %654 = vmatpush1.xpose.msra.mxu0 0.0
        %655 = vmatprep.subr.mxu0 0.0
        %656 = vmatpush1.xpose.msra.mxu0 0.0
        %657 = vmatprep.subr.mxu0 0.0
        %658 = vmatpush1.xpose.msra.mxu0 0.0
        %659 = vmatprep.subr.mxu0 0.0
        %660 = vmatpush1.xpose.msra.mxu0 0.0
        %661 = vmatprep.subr.mxu0 0.0
        %662 = vmatpush1.xpose.msra.mxu0 0.0
        %663 = vmatprep.subr.mxu0 0.0
        %664 = vmatpush1.xpose.msra.mxu0 0.0
        %665 = vmatprep.subr.mxu0 0.0
        %666 = vmatpush1.xpose.msra.mxu0 0.0
        %667 = vmatprep.subr.mxu0 0.0
        %668 = vmatpush1.xpose.msra.mxu0 0.0
        %669 = vmatprep.subr.mxu0 0.0
        %670 = vmatpush1.xpose.msra.mxu0 0.0
        %671 = vmatprep.subr.mxu0 0.0
        %672 = vmatpush1.xpose.msra.mxu0 0.0
        %673 = vmatprep.subr.mxu0 0.0
        %674 = vmatpush1.xpose.msra.mxu0 0.0
        %675 = vmatprep.subr.mxu0 0.0
        %676 = vmatpush1.xpose.msra.mxu0 0.0
        %677 = vmatprep.mubr.f32.mxu0 0.0
        %678 = vmatmul.mubr.f32.gmra.mrb[0].mxu0 %v609
        %v679 = vpop.f32.mrb[0].mxu0
        %v680 = vadd.f32 %v604, %v679
        %v681 = vpop.f32.mrb[0].mxu0
        %682 = vdwg.mxu0
        %v683 = vsel %vm335, %v680, -inf
        %684 = vmax.xlane.f32.xlu0 %v683
        %v685 = vpop.xlane.xlu0 %684
        %v686 = vsub.f32 %v680, %v685
        %v687 = vmul.f32 %v686, 1.442695
        %v688 = vpow.pop %v687
        %v689 = vsel %vm335, %v688, 0.0
        %690 = vadd.xlane.f32.xlu0 %v689
        %v691 = vpop.xlane.xlu0 %690
        %v692 = vrcp.pop %v691
        %v693 = vmul.f32 %v688, %v692
        %s694 = scalar_lea.vmem %s241, 16 [#allocation4]
        %695 = vst.msk [vmem:[%s694] sm:$0xff] %vm335, %v693
        %v698 = vsel %vm335, %v693, 0
        %700 = vmatprep.subr.mxu0 0.0
        %701 = vmatpush1.msra.mxu0 %v607
        %702 = vmatprep.subr.mxu0 0.0
        %703 = vmatpush1.msra.mxu0 0.0
        %704 = vmatprep.subr.mxu0 0.0
        %705 = vmatpush1.msra.mxu0 0.0
        %706 = vmatprep.subr.mxu0 0.0
        %707 = vmatpush1.msra.mxu0 0.0
        %708 = vmatprep.subr.mxu0 0.0
        %709 = vmatpush1.msra.mxu0 0.0
        %710 = vmatprep.subr.mxu0 0.0
        %711 = vmatpush1.msra.mxu0 0.0
        %712 = vmatprep.subr.mxu0 0.0
        %713 = vmatpush1.msra.mxu0 0.0
        %714 = vmatprep.subr.mxu0 0.0
        %715 = vmatpush1.msra.mxu0 0.0
        %716 = vmatprep.subr.mxu0 0.0
        %717 = vmatpush1.msra.mxu0 0.0
        %718 = vmatprep.subr.mxu0 0.0
        %719 = vmatpush1.msra.mxu0 0.0
        %720 = vmatprep.subr.mxu0 0.0
        %721 = vmatpush1.msra.mxu0 0.0
        %722 = vmatprep.subr.mxu0 0.0
        %723 = vmatpush1.msra.mxu0 0.0
        %724 = vmatprep.subr.mxu0 0.0
        %725 = vmatpush1.msra.mxu0 0.0
        %726 = vmatprep.subr.mxu0 0.0
        %727 = vmatpush1.msra.mxu0 0.0
        %728 = vmatprep.subr.mxu0 0.0
        %729 = vmatpush1.msra.mxu0 0.0
        %730 = vmatprep.subr.mxu0 0.0
        %731 = vmatpush1.msra.mxu0 0.0
        %732 = vmatprep.subr.mxu0 0.0
        %733 = vmatpush1.msra.mxu0 0.0
        %734 = vmatprep.subr.mxu0 0.0
        %735 = vmatpush1.msra.mxu0 0.0
        %736 = vmatprep.subr.mxu0 0.0
        %737 = vmatpush1.msra.mxu0 0.0
        %738 = vmatprep.subr.mxu0 0.0
        %739 = vmatpush1.msra.mxu0 0.0
        %740 = vmatprep.subr.mxu0 0.0
        %741 = vmatpush1.msra.mxu0 0.0
        %742 = vmatprep.subr.mxu0 0.0
        %743 = vmatpush1.msra.mxu0 0.0
        %744 = vmatprep.subr.mxu0 0.0
        %745 = vmatpush1.msra.mxu0 0.0
        %746 = vmatprep.subr.mxu0 0.0
        %747 = vmatpush1.msra.mxu0 0.0
        %748 = vmatprep.subr.mxu0 0.0
        %749 = vmatpush1.msra.mxu0 0.0
        %750 = vmatprep.subr.mxu0 0.0
        %751 = vmatpush1.msra.mxu0 0.0
        %752 = vmatprep.subr.mxu0 0.0
        %753 = vmatpush1.msra.mxu0 0.0
        %754 = vmatprep.subr.mxu0 0.0
        %755 = vmatpush1.msra.mxu0 0.0
        %756 = vmatprep.subr.mxu0 0.0
        %757 = vmatpush1.msra.mxu0 0.0
        %758 = vmatprep.subr.mxu0 0.0
        %759 = vmatpush1.msra.mxu0 0.0
        %760 = vmatprep.subr.mxu0 0.0
        %761 = vmatpush1.msra.mxu0 0.0
        %762 = vmatprep.subr.mxu0 0.0
        %763 = vmatpush1.msra.mxu0 0.0
        %764 = vmatprep.mubr.f32.mxu0 0.0
        %765 = vmatmul.mubr.f32.gmra.mrb[0].mxu0 %v698
        %v766 = vpop.f32.mrb[0].mxu0
        %v767 = vadd.f32 0.0, %v766
        %v768 = vpop.f32.mrb[0].mxu0
        %769 = vdwg.mxu0
        %771 = vrot.lane.b32.xlu0 %v767, 8
        %v772 = vpop.permute.xlu0 %771
        %vm774 = vcmask 97344
        %775 = vst.msk [vmem:[%s234] sm:$0xff] %vm774, %v772
        %v776 = vld [vmem:[%s253] sm:$0xff]
        %s777 = scalar_lea.vmem %s245, 24
        %v778 = vld [vmem:[%s777] sm:$0xff]
        %v779 = vmul.f32 %v778, 0.5
        %s780 = scalar_lea.vmem %s249, 24
        %v781 = vld [vmem:[%s780] sm:$0xff]
        %783 = vrot.lane.b32.xlu0 %v776, 116
        %v784 = vpop.permute.xlu0 %783
        %v786 = vsel %vm258, %v779, 0
        %v788 = vsel %vm258, %v784, 0
        %790 = vmatprep.subr.mxu0 0.0
        %791 = vmatpush1.xpose.msra.mxu0 %v788
        %792 = vmatprep.subr.mxu0 0.0
        %793 = vmatpush1.xpose.msra.mxu0 0.0
        %794 = vmatprep.subr.mxu0 0.0
        %795 = vmatpush1.xpose.msra.mxu0 0.0
        %796 = vmatprep.subr.mxu0 0.0
        %797 = vmatpush1.xpose.msra.mxu0 0.0
        %798 = vmatprep.subr.mxu0 0.0
        %799 = vmatpush1.xpose.msra.mxu0 0.0
        %800 = vmatprep.subr.mxu0 0.0
        %801 = vmatpush1.xpose.msra.mxu0 0.0
        %802 = vmatprep.subr.mxu0 0.0
        %803 = vmatpush1.xpose.msra.mxu0 0.0
        %804 = vmatprep.subr.mxu0 0.0
        %805 = vmatpush1.xpose.msra.mxu0 0.0
        %806 = vmatprep.subr.mxu0 0.0
        %807 = vmatpush1.xpose.msra.mxu0 0.0
        %808 = vmatprep.subr.mxu0 0.0
        %809 = vmatpush1.xpose.msra.mxu0 0.0
        %810 = vmatprep.subr.mxu0 0.0
        %811 = vmatpush1.xpose.msra.mxu0 0.0
        %812 = vmatprep.subr.mxu0 0.0
        %813 = vmatpush1.xpose.msra.mxu0 0.0
        %814 = vmatprep.subr.mxu0 0.0
        %815 = vmatpush1.xpose.msra.mxu0 0.0
        %816 = vmatprep.subr.mxu0 0.0
        %817 = vmatpush1.xpose.msra.mxu0 0.0
        %818 = vmatprep.subr.mxu0 0.0
        %819 = vmatpush1.xpose.msra.mxu0 0.0
        %820 = vmatprep.subr.mxu0 0.0
        %821 = vmatpush1.xpose.msra.mxu0 0.0
        %822 = vmatprep.subr.mxu0 0.0
        %823 = vmatpush1.xpose.msra.mxu0 0.0
        %824 = vmatprep.subr.mxu0 0.0
        %825 = vmatpush1.xpose.msra.mxu0 0.0
        %826 = vmatprep.subr.mxu0 0.0
        %827 = vmatpush1.xpose.msra.mxu0 0.0
        %828 = vmatprep.subr.mxu0 0.0
        %829 = vmatpush1.xpose.msra.mxu0 0.0
        %830 = vmatprep.subr.mxu0 0.0
        %831 = vmatpush1.xpose.msra.mxu0 0.0
        %832 = vmatprep.subr.mxu0 0.0
        %833 = vmatpush1.xpose.msra.mxu0 0.0
        %834 = vmatprep.subr.mxu0 0.0
        %835 = vmatpush1.xpose.msra.mxu0 0.0
        %836 = vmatprep.subr.mxu0 0.0
        %837 = vmatpush1.xpose.msra.mxu0 0.0
        %838 = vmatprep.subr.mxu0 0.0
        %839 = vmatpush1.xpose.msra.mxu0 0.0
        %840 = vmatprep.subr.mxu0 0.0
        %841 = vmatpush1.xpose.msra.mxu0 0.0
        %842 = vmatprep.subr.mxu0 0.0
        %843 = vmatpush1.xpose.msra.mxu0 0.0
        %844 = vmatprep.subr.mxu0 0.0
        %845 = vmatpush1.xpose.msra.mxu0 0.0
        %846 = vmatprep.subr.mxu0 0.0
        %847 = vmatpush1.xpose.msra.mxu0 0.0
        %848 = vmatprep.subr.mxu0 0.0
        %849 = vmatpush1.xpose.msra.mxu0 0.0
        %850 = vmatprep.subr.mxu0 0.0
        %851 = vmatpush1.xpose.msra.mxu0 0.0
        %852 = vmatprep.subr.mxu0 0.0
        %853 = vmatpush1.xpose.msra.mxu0 0.0
        %854 = vmatprep.mubr.f32.mxu0 0.0
        %855 = vmatmul.mubr.f32.gmra.mrb[0].mxu0 %v786
        %v856 = vpop.f32.mrb[0].mxu0
        %v857 = vadd.f32 %v781, %v856
        %v858 = vpop.f32.mrb[0].mxu0
        %859 = vdwg.mxu0
        %v860 = vsel %vm335, %v857, -inf
        %861 = vmax.xlane.f32.xlu0 %v860
        %v862 = vpop.xlane.xlu0 %861
        %v863 = vsub.f32 %v857, %v862
        %v864 = vmul.f32 %v863, 1.442695
        %v865 = vpow.pop %v864
        %v866 = vsel %vm335, %v865, 0.0
        %867 = vadd.xlane.f32.xlu0 %v866
        %v868 = vpop.xlane.xlu0 %867
        %v869 = vrcp.pop %v868
        %v870 = vmul.f32 %v865, %v869
        %s871 = scalar_lea.vmem %s241, 24 [#allocation4]
        %872 = vst.msk [vmem:[%s871] sm:$0xff] %vm335, %v870
        %v875 = vsel %vm335, %v870, 0
        %877 = vmatprep.subr.mxu0 0.0
        %878 = vmatpush1.msra.mxu0 %v784
        %879 = vmatprep.subr.mxu0 0.0
        %880 = vmatpush1.msra.mxu0 0.0
        %881 = vmatprep.subr.mxu0 0.0
        %882 = vmatpush1.msra.mxu0 0.0
        %883 = vmatprep.subr.mxu0 0.0
        %884 = vmatpush1.msra.mxu0 0.0
        %885 = vmatprep.subr.mxu0 0.0
        %886 = vmatpush1.msra.mxu0 0.0
        %887 = vmatprep.subr.mxu0 0.0
        %888 = vmatpush1.msra.mxu0 0.0
        %889 = vmatprep.subr.mxu0 0.0
        %890 = vmatpush1.msra.mxu0 0.0
        %891 = vmatprep.subr.mxu0 0.0
        %892 = vmatpush1.msra.mxu0 0.0
        %893 = vmatprep.subr.mxu0 0.0
        %894 = vmatpush1.msra.mxu0 0.0
        %895 = vmatprep.subr.mxu0 0.0
        %896 = vmatpush1.msra.mxu0 0.0
        %897 = vmatprep.subr.mxu0 0.0
        %898 = vmatpush1.msra.mxu0 0.0
        %899 = vmatprep.subr.mxu0 0.0
        %900 = vmatpush1.msra.mxu0 0.0
        %901 = vmatprep.subr.mxu0 0.0
        %902 = vmatpush1.msra.mxu0 0.0
        %903 = vmatprep.subr.mxu0 0.0
        %904 = vmatpush1.msra.mxu0 0.0
        %905 = vmatprep.subr.mxu0 0.0
        %906 = vmatpush1.msra.mxu0 0.0
        %907 = vmatprep.subr.mxu0 0.0
        %908 = vmatpush1.msra.mxu0 0.0
        %909 = vmatprep.subr.mxu0 0.0
        %910 = vmatpush1.msra.mxu0 0.0
        %911 = vmatprep.subr.mxu0 0.0
        %912 = vmatpush1.msra.mxu0 0.0
        %913 = vmatprep.subr.mxu0 0.0
        %914 = vmatpush1.msra.mxu0 0.0
        %915 = vmatprep.subr.mxu0 0.0
        %916 = vmatpush1.msra.mxu0 0.0
        %917 = vmatprep.subr.mxu0 0.0
        %918 = vmatpush1.msra.mxu0 0.0
        %919 = vmatprep.subr.mxu0 0.0
        %920 = vmatpush1.msra.mxu0 0.0
        %921 = vmatprep.subr.mxu0 0.0
        %922 = vmatpush1.msra.mxu0 0.0
        %923 = vmatprep.subr.mxu0 0.0
        %924 = vmatpush1.msra.mxu0 0.0
        %925 = vmatprep.subr.mxu0 0.0
        %926 = vmatpush1.msra.mxu0 0.0
        %927 = vmatprep.subr.mxu0 0.0
        %928 = vmatpush1.msra.mxu0 0.0
        %929 = vmatprep.subr.mxu0 0.0
        %930 = vmatpush1.msra.mxu0 0.0
        %931 = vmatprep.subr.mxu0 0.0
        %932 = vmatpush1.msra.mxu0 0.0
        %933 = vmatprep.subr.mxu0 0.0
        %934 = vmatpush1.msra.mxu0 0.0
        %935 = vmatprep.subr.mxu0 0.0
        %936 = vmatpush1.msra.mxu0 0.0
        %937 = vmatprep.subr.mxu0 0.0
        %938 = vmatpush1.msra.mxu0 0.0
        %939 = vmatprep.subr.mxu0 0.0
        %940 = vmatpush1.msra.mxu0 0.0
        %941 = vmatprep.mubr.f32.mxu0 0.0
        %942 = vmatmul.mubr.f32.gmra.mrb[0].mxu0 %v875
        %v943 = vpop.f32.mrb[0].mxu0
        %v944 = vadd.f32 0.0, %v943
        %v945 = vpop.f32.mrb[0].mxu0
        %946 = vdwg.mxu0
        %948 = vrot.lane.b32.xlu0 %v944, 12
        %v949 = vpop.permute.xlu0 %948
        %vm951 = vcmask 130144
        %952 = vst.msk [vmem:[%s234] sm:$0xff] %vm951, %v949
        %v953 = vld [vmem:[%s253] sm:$0xff]
        %s954 = scalar_lea.vmem %s245, 32
        %v955 = vld [vmem:[%s954] sm:$0xff]
        %v956 = vmul.f32 %v955, 0.5
        %s957 = scalar_lea.vmem %s249, 32
        %v958 = vld [vmem:[%s957] sm:$0xff]
        %960 = vrot.lane.b32.xlu0 %v953, 112
        %v961 = vpop.permute.xlu0 %960
        %v963 = vsel %vm258, %v956, 0
        %v965 = vsel %vm258, %v961, 0
        %967 = vmatprep.subr.mxu0 0.0
        %968 = vmatpush1.xpose.msra.mxu0 %v965
        %969 = vmatprep.subr.mxu0 0.0
        %970 = vmatpush1.xpose.msra.mxu0 0.0
        %971 = vmatprep.subr.mxu0 0.0
        %972 = vmatpush1.xpose.msra.mxu0 0.0
        %973 = vmatprep.subr.mxu0 0.0
        %974 = vmatpush1.xpose.msra.mxu0 0.0
        %975 = vmatprep.subr.mxu0 0.0
        %976 = vmatpush1.xpose.msra.mxu0 0.0
        %977 = vmatprep.subr.mxu0 0.0
        %978 = vmatpush1.xpose.msra.mxu0 0.0
        %979 = vmatprep.subr.mxu0 0.0
        %980 = vmatpush1.xpose.msra.mxu0 0.0
        %981 = vmatprep.subr.mxu0 0.0
        %982 = vmatpush1.xpose.msra.mxu0 0.0
        %983 = vmatprep.subr.mxu0 0.0
        %984 = vmatpush1.xpose.msra.mxu0 0.0
        %985 = vmatprep.subr.mxu0 0.0
        %986 = vmatpush1.xpose.msra.mxu0 0.0
        %987 = vmatprep.subr.mxu0 0.0
        %988 = vmatpush1.xpose.msra.mxu0 0.0
        %989 = vmatprep.subr.mxu0 0.0
        %990 = vmatpush1.xpose.msra.mxu0 0.0
        %991 = vmatprep.subr.mxu0 0.0
        %992 = vmatpush1.xpose.msra.mxu0 0.0
        %993 = vmatprep.subr.mxu0 0.0
        %994 = vmatpush1.xpose.msra.mxu0 0.0
        %995 = vmatprep.subr.mxu0 0.0
        %996 = vmatpush1.xpose.msra.mxu0 0.0
        %997 = vmatprep.subr.mxu0 0.0
        %998 = vmatpush1.xpose.msra.mxu0 0.0
        %999 = vmatprep.subr.mxu0 0.0
        %1000 = vmatpush1.xpose.msra.mxu0 0.0
        %1001 = vmatprep.subr.mxu0 0.0
        %1002 = vmatpush1.xpose.msra.mxu0 0.0
        %1003 = vmatprep.subr.mxu0 0.0
        %1004 = vmatpush1.xpose.msra.mxu0 0.0
        %1005 = vmatprep.subr.mxu0 0.0
        %1006 = vmatpush1.xpose.msra.mxu0 0.0
        %1007 = vmatprep.subr.mxu0 0.0
        %1008 = vmatpush1.xpose.msra.mxu0 0.0
        %1009 = vmatprep.subr.mxu0 0.0
        %1010 = vmatpush1.xpose.msra.mxu0 0.0
        %1011 = vmatprep.subr.mxu0 0.0
        %1012 = vmatpush1.xpose.msra.mxu0 0.0
        %1013 = vmatprep.subr.mxu0 0.0
        %1014 = vmatpush1.xpose.msra.mxu0 0.0
        %1015 = vmatprep.subr.mxu0 0.0
        %1016 = vmatpush1.xpose.msra.mxu0 0.0
        %1017 = vmatprep.subr.mxu0 0.0
        %1018 = vmatpush1.xpose.msra.mxu0 0.0
        %1019 = vmatprep.subr.mxu0 0.0
        %1020 = vmatpush1.xpose.msra.mxu0 0.0
        %1021 = vmatprep.subr.mxu0 0.0
        %1022 = vmatpush1.xpose.msra.mxu0 0.0
        %1023 = vmatprep.subr.mxu0 0.0
        %1024 = vmatpush1.xpose.msra.mxu0 0.0
        %1025 = vmatprep.subr.mxu0 0.0
        %1026 = vmatpush1.xpose.msra.mxu0 0.0
        %1027 = vmatprep.subr.mxu0 0.0
        %1028 = vmatpush1.xpose.msra.mxu0 0.0
        %1029 = vmatprep.subr.mxu0 0.0
        %1030 = vmatpush1.xpose.msra.mxu0 0.0
        %1031 = vmatprep.mubr.f32.mxu0 0.0
        %1032 = vmatmul.mubr.f32.gmra.mrb[0].mxu0 %v963
        %v1033 = vpop.f32.mrb[0].mxu0
        %v1034 = vadd.f32 %v958, %v1033
        %v1035 = vpop.f32.mrb[0].mxu0
        %1036 = vdwg.mxu0
        %v1037 = vsel %vm335, %v1034, -inf
        %1038 = vmax.xlane.f32.xlu0 %v1037
        %v1039 = vpop.xlane.xlu0 %1038
        %v1040 = vsub.f32 %v1034, %v1039
        %v1041 = vmul.f32 %v1040, 1.442695
        %v1042 = vpow.pop %v1041
        %v1043 = vsel %vm335, %v1042, 0.0
        %1044 = vadd.xlane.f32.xlu0 %v1043
        %v1045 = vpop.xlane.xlu0 %1044
        %v1046 = vrcp.pop %v1045
        %v1047 = vmul.f32 %v1042, %v1046
        %s1048 = scalar_lea.vmem %s241, 32 [#allocation4]
        %1049 = vst.msk [vmem:[%s1048] sm:$0xff] %vm335, %v1047
        %v1052 = vsel %vm335, %v1047, 0
        %1054 = vmatprep.subr.mxu0 0.0
        %1055 = vmatpush1.msra.mxu0 %v961
        %1056 = vmatprep.subr.mxu0 0.0
        %1057 = vmatpush1.msra.mxu0 0.0
        %1058 = vmatprep.subr.mxu0 0.0
        %1059 = vmatpush1.msra.mxu0 0.0
        %1060 = vmatprep.subr.mxu0 0.0
        %1061 = vmatpush1.msra.mxu0 0.0
        %1062 = vmatprep.subr.mxu0 0.0
        %1063 = vmatpush1.msra.mxu0 0.0
        %1064 = vmatprep.subr.mxu0 0.0
        %1065 = vmatpush1.msra.mxu0 0.0
        %1066 = vmatprep.subr.mxu0 0.0
        %1067 = vmatpush1.msra.mxu0 0.0
        %1068 = vmatprep.subr.mxu0 0.0
        %1069 = vmatpush1.msra.mxu0 0.0
        %1070 = vmatprep.subr.mxu0 0.0
        %1071 = vmatpush1.msra.mxu0 0.0
        %1072 = vmatprep.subr.mxu0 0.0
        %1073 = vmatpush1.msra.mxu0 0.0
        %1074 = vmatprep.subr.mxu0 0.0
        %1075 = vmatpush1.msra.mxu0 0.0
        %1076 = vmatprep.subr.mxu0 0.0
        %1077 = vmatpush1.msra.mxu0 0.0
        %1078 = vmatprep.subr.mxu0 0.0
        %1079 = vmatpush1.msra.mxu0 0.0
        %1080 = vmatprep.subr.mxu0 0.0
        %1081 = vmatpush1.msra.mxu0 0.0
        %1082 = vmatprep.subr.mxu0 0.0
        %1083 = vmatpush1.msra.mxu0 0.0
        %1084 = vmatprep.subr.mxu0 0.0
        %1085 = vmatpush1.msra.mxu0 0.0
        %1086 = vmatprep.subr.mxu0 0.0
        %1087 = vmatpush1.msra.mxu0 0.0
        %1088 = vmatprep.subr.mxu0 0.0
        %1089 = vmatpush1.msra.mxu0 0.0
        %1090 = vmatprep.subr.mxu0 0.0
        %1091 = vmatpush1.msra.mxu0 0.0
        %1092 = vmatprep.subr.mxu0 0.0
        %1093 = vmatpush1.msra.mxu0 0.0
        %1094 = vmatprep.subr.mxu0 0.0
        %1095 = vmatpush1.msra.mxu0 0.0
        %1096 = vmatprep.subr.mxu0 0.0
        %1097 = vmatpush1.msra.mxu0 0.0
        %1098 = vmatprep.subr.mxu0 0.0
        %1099 = vmatpush1.msra.mxu0 0.0
        %1100 = vmatprep.subr.mxu0 0.0
        %1101 = vmatpush1.msra.mxu0 0.0
        %1102 = vmatprep.subr.mxu0 0.0
        %1103 = vmatpush1.msra.mxu0 0.0
        %1104 = vmatprep.subr.mxu0 0.0
        %1105 = vmatpush1.msra.mxu0 0.0
        %1106 = vmatprep.subr.mxu0 0.0
        %1107 = vmatpush1.msra.mxu0 0.0
        %1108 = vmatprep.subr.mxu0 0.0
        %1109 = vmatpush1.msra.mxu0 0.0
        %1110 = vmatprep.subr.mxu0 0.0
        %1111 = vmatpush1.msra.mxu0 0.0
        %1112 = vmatprep.subr.mxu0 0.0
        %1113 = vmatpush1.msra.mxu0 0.0
        %1114 = vmatprep.subr.mxu0 0.0
        %1115 = vmatpush1.msra.mxu0 0.0
        %1116 = vmatprep.subr.mxu0 0.0
        %1117 = vmatpush1.msra.mxu0 0.0
        %1118 = vmatprep.mubr.f32.mxu0 0.0
        %1119 = vmatmul.mubr.f32.gmra.mrb[0].mxu0 %v1052
        %v1120 = vpop.f32.mrb[0].mxu0
        %v1121 = vadd.f32 0.0, %v1120
        %v1122 = vpop.f32.mrb[0].mxu0
        %1123 = vdwg.mxu0
        %1125 = vrot.lane.b32.xlu0 %v1121, 16
        %v1126 = vpop.permute.xlu0 %1125
        %vm1128 = vcmask 162944
        %1129 = vst.msk [vmem:[%s234] sm:$0xff] %vm1128, %v1126
        %v1130 = vld [vmem:[%s253] sm:$0xff]
        %s1131 = scalar_lea.vmem %s245, 40
        %v1132 = vld [vmem:[%s1131] sm:$0xff]
        %v1133 = vmul.f32 %v1132, 0.5
        %s1134 = scalar_lea.vmem %s249, 40
        %v1135 = vld [vmem:[%s1134] sm:$0xff]
        %1137 = vrot.lane.b32.xlu0 %v1130, 108
        %v1138 = vpop.permute.xlu0 %1137
        %v1140 = vsel %vm258, %v1133, 0
        %v1142 = vsel %vm258, %v1138, 0
        %1144 = vmatprep.subr.mxu0 0.0
        %1145 = vmatpush1.xpose.msra.mxu0 %v1142
        %1146 = vmatprep.subr.mxu0 0.0
        %1147 = vmatpush1.xpose.msra.mxu0 0.0
        %1148 = vmatprep.subr.mxu0 0.0
        %1149 = vmatpush1.xpose.msra.mxu0 0.0
        %1150 = vmatprep.subr.mxu0 0.0
        %1151 = vmatpush1.xpose.msra.mxu0 0.0
        %1152 = vmatprep.subr.mxu0 0.0
        %1153 = vmatpush1.xpose.msra.mxu0 0.0
        %1154 = vmatprep.subr.mxu0 0.0
        %1155 = vmatpush1.xpose.msra.mxu0 0.0
        %1156 = vmatprep.subr.mxu0 0.0
        %1157 = vmatpush1.xpose.msra.mxu0 0.0
        %1158 = vmatprep.subr.mxu0 0.0
        %1159 = vmatpush1.xpose.msra.mxu0 0.0
        %1160 = vmatprep.subr.mxu0 0.0
        %1161 = vmatpush1.xpose.msra.mxu0 0.0
        %1162 = vmatprep.subr.mxu0 0.0
        %1163 = vmatpush1.xpose.msra.mxu0 0.0
        %1164 = vmatprep.subr.mxu0 0.0
        %1165 = vmatpush1.xpose.msra.mxu0 0.0
        %1166 = vmatprep.subr.mxu0 0.0
        %1167 = vmatpush1.xpose.msra.mxu0 0.0
        %1168 = vmatprep.subr.mxu0 0.0
        %1169 = vmatpush1.xpose.msra.mxu0 0.0
        %1170 = vmatprep.subr.mxu0 0.0
        %1171 = vmatpush1.xpose.msra.mxu0 0.0
        %1172 = vmatprep.subr.mxu0 0.0
        %1173 = vmatpush1.xpose.msra.mxu0 0.0
        %1174 = vmatprep.subr.mxu0 0.0
        %1175 = vmatpush1.xpose.msra.mxu0 0.0
        %1176 = vmatprep.subr.mxu0 0.0
        %1177 = vmatpush1.xpose.msra.mxu0 0.0
        %1178 = vmatprep.subr.mxu0 0.0
        %1179 = vmatpush1.xpose.msra.mxu0 0.0
        %1180 = vmatprep.subr.mxu0 0.0
        %1181 = vmatpush1.xpose.msra.mxu0 0.0
        %1182 = vmatprep.subr.mxu0 0.0
        %1183 = vmatpush1.xpose.msra.mxu0 0.0
        %1184 = vmatprep.subr.mxu0 0.0
        %1185 = vmatpush1.xpose.msra.mxu0 0.0
        %1186 = vmatprep.subr.mxu0 0.0
        %1187 = vmatpush1.xpose.msra.mxu0 0.0
        %1188 = vmatprep.subr.mxu0 0.0
        %1189 = vmatpush1.xpose.msra.mxu0 0.0
        %1190 = vmatprep.subr.mxu0 0.0
        %1191 = vmatpush1.xpose.msra.mxu0 0.0
        %1192 = vmatprep.subr.mxu0 0.0
        %1193 = vmatpush1.xpose.msra.mxu0 0.0
        %1194 = vmatprep.subr.mxu0 0.0
        %1195 = vmatpush1.xpose.msra.mxu0 0.0
        %1196 = vmatprep.subr.mxu0 0.0
        %1197 = vmatpush1.xpose.msra.mxu0 0.0
        %1198 = vmatprep.subr.mxu0 0.0
        %1199 = vmatpush1.xpose.msra.mxu0 0.0
        %1200 = vmatprep.subr.mxu0 0.0
        %1201 = vmatpush1.xpose.msra.mxu0 0.0
        %1202 = vmatprep.subr.mxu0 0.0
        %1203 = vmatpush1.xpose.msra.mxu0 0.0
        %1204 = vmatprep.subr.mxu0 0.0
        %1205 = vmatpush1.xpose.msra.mxu0 0.0
        %1206 = vmatprep.subr.mxu0 0.0
        %1207 = vmatpush1.xpose.msra.mxu0 0.0
        %1208 = vmatprep.mubr.f32.mxu0 0.0
        %1209 = vmatmul.mubr.f32.gmra.mrb[0].mxu0 %v1140
        %v1210 = vpop.f32.mrb[0].mxu0
        %v1211 = vadd.f32 %v1135, %v1210
        %v1212 = vpop.f32.mrb[0].mxu0
        %1213 = vdwg.mxu0
        %v1214 = vsel %vm335, %v1211, -inf
        %1215 = vmax.xlane.f32.xlu0 %v1214
        %v1216 = vpop.xlane.xlu0 %1215
        %v1217 = vsub.f32 %v1211, %v1216
        %v1218 = vmul.f32 %v1217, 1.442695
        %v1219 = vpow.pop %v1218
        %v1220 = vsel %vm335, %v1219, 0.0
        %1221 = vadd.xlane.f32.xlu0 %v1220
        %v1222 = vpop.xlane.xlu0 %1221
        %v1223 = vrcp.pop %v1222
        %v1224 = vmul.f32 %v1219, %v1223
        %s1225 = scalar_lea.vmem %s241, 40 [#allocation4]
        %1226 = vst.msk [vmem:[%s1225] sm:$0xff] %vm335, %v1224
        %v1229 = vsel %vm335, %v1224, 0
        %1231 = vmatprep.subr.mxu0 0.0
        %1232 = vmatpush1.msra.mxu0 %v1138
        %1233 = vmatprep.subr.mxu0 0.0
        %1234 = vmatpush1.msra.mxu0 0.0
        %1235 = vmatprep.subr.mxu0 0.0
        %1236 = vmatpush1.msra.mxu0 0.0
        %1237 = vmatprep.subr.mxu0 0.0
        %1238 = vmatpush1.msra.mxu0 0.0
        %1239 = vmatprep.subr.mxu0 0.0
        %1240 = vmatpush1.msra.mxu0 0.0
        %1241 = vmatprep.subr.mxu0 0.0
        %1242 = vmatpush1.msra.mxu0 0.0
        %1243 = vmatprep.subr.mxu0 0.0
        %1244 = vmatpush1.msra.mxu0 0.0
        %1245 = vmatprep.subr.mxu0 0.0
        %1246 = vmatpush1.msra.mxu0 0.0
        %1247 = vmatprep.subr.mxu0 0.0
        %1248 = vmatpush1.msra.mxu0 0.0
        %1249 = vmatprep.subr.mxu0 0.0
        %1250 = vmatpush1.msra.mxu0 0.0
        %1251 = vmatprep.subr.mxu0 0.0
        %1252 = vmatpush1.msra.mxu0 0.0
        %1253 = vmatprep.subr.mxu0 0.0
        %1254 = vmatpush1.msra.mxu0 0.0
        %1255 = vmatprep.subr.mxu0 0.0
        %1256 = vmatpush1.msra.mxu0 0.0
        %1257 = vmatprep.subr.mxu0 0.0
        %1258 = vmatpush1.msra.mxu0 0.0
        %1259 = vmatprep.subr.mxu0 0.0
        %1260 = vmatpush1.msra.mxu0 0.0
        %1261 = vmatprep.subr.mxu0 0.0
        %1262 = vmatpush1.msra.mxu0 0.0
        %1263 = vmatprep.subr.mxu0 0.0
        %1264 = vmatpush1.msra.mxu0 0.0
        %1265 = vmatprep.subr.mxu0 0.0
        %1266 = vmatpush1.msra.mxu0 0.0
        %1267 = vmatprep.subr.mxu0 0.0
        %1268 = vmatpush1.msra.mxu0 0.0
        %1269 = vmatprep.subr.mxu0 0.0
        %1270 = vmatpush1.msra.mxu0 0.0
        %1271 = vmatprep.subr.mxu0 0.0
        %1272 = vmatpush1.msra.mxu0 0.0
        %1273 = vmatprep.subr.mxu0 0.0
        %1274 = vmatpush1.msra.mxu0 0.0
        %1275 = vmatprep.subr.mxu0 0.0
        %1276 = vmatpush1.msra.mxu0 0.0
        %1277 = vmatprep.subr.mxu0 0.0
        %1278 = vmatpush1.msra.mxu0 0.0
        %1279 = vmatprep.subr.mxu0 0.0
        %1280 = vmatpush1.msra.mxu0 0.0
        %1281 = vmatprep.subr.mxu0 0.0
        %1282 = vmatpush1.msra.mxu0 0.0
        %1283 = vmatprep.subr.mxu0 0.0
        %1284 = vmatpush1.msra.mxu0 0.0
        %1285 = vmatprep.subr.mxu0 0.0
        %1286 = vmatpush1.msra.mxu0 0.0
        %1287 = vmatprep.subr.mxu0 0.0
        %1288 = vmatpush1.msra.mxu0 0.0
        %1289 = vmatprep.subr.mxu0 0.0
        %1290 = vmatpush1.msra.mxu0 0.0
        %1291 = vmatprep.subr.mxu0 0.0
        %1292 = vmatpush1.msra.mxu0 0.0
        %1293 = vmatprep.subr.mxu0 0.0
        %1294 = vmatpush1.msra.mxu0 0.0
        %1295 = vmatprep.mubr.f32.mxu0 0.0
        %1296 = vmatmul.mubr.f32.gmra.mrb[0].mxu0 %v1229
        %v1297 = vpop.f32.mrb[0].mxu0
        %v1298 = vadd.f32 0.0, %v1297
        %v1299 = vpop.f32.mrb[0].mxu0
        %1300 = vdwg.mxu0
        %1302 = vrot.lane.b32.xlu0 %v1298, 20
        %v1303 = vpop.permute.xlu0 %1302
        %vm1305 = vcmask 195744
        %1306 = vst.msk [vmem:[%s234] sm:$0xff] %vm1305, %v1303
        %v1307 = vld [vmem:[%s253] sm:$0xff]
        %s1308 = scalar_lea.vmem %s245, 48
        %v1309 = vld [vmem:[%s1308] sm:$0xff]
        %v1310 = vmul.f32 %v1309, 0.5
        %s1311 = scalar_lea.vmem %s249, 48
        %v1312 = vld [vmem:[%s1311] sm:$0xff]
        %1314 = vrot.lane.b32.xlu0 %v1307, 104
        %v1315 = vpop.permute.xlu0 %1314
        %v1317 = vsel %vm258, %v1310, 0
        %v1319 = vsel %vm258, %v1315, 0
        %1321 = vmatprep.subr.mxu0 0.0
        %1322 = vmatpush1.xpose.msra.mxu0 %v1319
        %1323 = vmatprep.subr.mxu0 0.0
        %1324 = vmatpush1.xpose.msra.mxu0 0.0
        %1325 = vmatprep.subr.mxu0 0.0
        %1326 = vmatpush1.xpose.msra.mxu0 0.0
        %1327 = vmatprep.subr.mxu0 0.0
        %1328 = vmatpush1.xpose.msra.mxu0 0.0
        %1329 = vmatprep.subr.mxu0 0.0
        %1330 = vmatpush1.xpose.msra.mxu0 0.0
        %1331 = vmatprep.subr.mxu0 0.0
        %1332 = vmatpush1.xpose.msra.mxu0 0.0
        %1333 = vmatprep.subr.mxu0 0.0
        %1334 = vmatpush1.xpose.msra.mxu0 0.0
        %1335 = vmatprep.subr.mxu0 0.0
        %1336 = vmatpush1.xpose.msra.mxu0 0.0
        %1337 = vmatprep.subr.mxu0 0.0
        %1338 = vmatpush1.xpose.msra.mxu0 0.0
        %1339 = vmatprep.subr.mxu0 0.0
        %1340 = vmatpush1.xpose.msra.mxu0 0.0
        %1341 = vmatprep.subr.mxu0 0.0
        %1342 = vmatpush1.xpose.msra.mxu0 0.0
        %1343 = vmatprep.subr.mxu0 0.0
        %1344 = vmatpush1.xpose.msra.mxu0 0.0
        %1345 = vmatprep.subr.mxu0 0.0
        %1346 = vmatpush1.xpose.msra.mxu0 0.0
        %1347 = vmatprep.subr.mxu0 0.0
        %1348 = vmatpush1.xpose.msra.mxu0 0.0
        %1349 = vmatprep.subr.mxu0 0.0
        %1350 = vmatpush1.xpose.msra.mxu0 0.0
        %1351 = vmatprep.subr.mxu0 0.0
        %1352 = vmatpush1.xpose.msra.mxu0 0.0
        %1353 = vmatprep.subr.mxu0 0.0
        %1354 = vmatpush1.xpose.msra.mxu0 0.0
        %1355 = vmatprep.subr.mxu0 0.0
        %1356 = vmatpush1.xpose.msra.mxu0 0.0
        %1357 = vmatprep.subr.mxu0 0.0
        %1358 = vmatpush1.xpose.msra.mxu0 0.0
        %1359 = vmatprep.subr.mxu0 0.0
        %1360 = vmatpush1.xpose.msra.mxu0 0.0
        %1361 = vmatprep.subr.mxu0 0.0
        %1362 = vmatpush1.xpose.msra.mxu0 0.0
        %1363 = vmatprep.subr.mxu0 0.0
        %1364 = vmatpush1.xpose.msra.mxu0 0.0
        %1365 = vmatprep.subr.mxu0 0.0
        %1366 = vmatpush1.xpose.msra.mxu0 0.0
        %1367 = vmatprep.subr.mxu0 0.0
        %1368 = vmatpush1.xpose.msra.mxu0 0.0
        %1369 = vmatprep.subr.mxu0 0.0
        %1370 = vmatpush1.xpose.msra.mxu0 0.0
        %1371 = vmatprep.subr.mxu0 0.0
        %1372 = vmatpush1.xpose.msra.mxu0 0.0
        %1373 = vmatprep.subr.mxu0 0.0
        %1374 = vmatpush1.xpose.msra.mxu0 0.0
        %1375 = vmatprep.subr.mxu0 0.0
        %1376 = vmatpush1.xpose.msra.mxu0 0.0
        %1377 = vmatprep.subr.mxu0 0.0
        %1378 = vmatpush1.xpose.msra.mxu0 0.0
        %1379 = vmatprep.subr.mxu0 0.0
        %1380 = vmatpush1.xpose.msra.mxu0 0.0
        %1381 = vmatprep.subr.mxu0 0.0
        %1382 = vmatpush1.xpose.msra.mxu0 0.0
        %1383 = vmatprep.subr.mxu0 0.0
        %1384 = vmatpush1.xpose.msra.mxu0 0.0
        %1385 = vmatprep.mubr.f32.mxu0 0.0
        %1386 = vmatmul.mubr.f32.gmra.mrb[0].mxu0 %v1317
        %v1387 = vpop.f32.mrb[0].mxu0
        %v1388 = vadd.f32 %v1312, %v1387
        %v1389 = vpop.f32.mrb[0].mxu0
        %1390 = vdwg.mxu0
        %v1391 = vsel %vm335, %v1388, -inf
        %1392 = vmax.xlane.f32.xlu0 %v1391
        %v1393 = vpop.xlane.xlu0 %1392
        %v1394 = vsub.f32 %v1388, %v1393
        %v1395 = vmul.f32 %v1394, 1.442695
        %v1396 = vpow.pop %v1395
        %v1397 = vsel %vm335, %v1396, 0.0
        %1398 = vadd.xlane.f32.xlu0 %v1397
        %v1399 = vpop.xlane.xlu0 %1398
        %v1400 = vrcp.pop %v1399
        %v1401 = vmul.f32 %v1396, %v1400
        %s1402 = scalar_lea.vmem %s241, 48 [#allocation4]
        %1403 = vst.msk [vmem:[%s1402] sm:$0xff] %vm335, %v1401
        %v1406 = vsel %vm335, %v1401, 0
        %1408 = vmatprep.subr.mxu0 0.0
        %1409 = vmatpush1.msra.mxu0 %v1315
        %1410 = vmatprep.subr.mxu0 0.0
        %1411 = vmatpush1.msra.mxu0 0.0
        %1412 = vmatprep.subr.mxu0 0.0
        %1413 = vmatpush1.msra.mxu0 0.0
        %1414 = vmatprep.subr.mxu0 0.0
        %1415 = vmatpush1.msra.mxu0 0.0
        %1416 = vmatprep.subr.mxu0 0.0
        %1417 = vmatpush1.msra.mxu0 0.0
        %1418 = vmatprep.subr.mxu0 0.0
        %1419 = vmatpush1.msra.mxu0 0.0
        %1420 = vmatprep.subr.mxu0 0.0
        %1421 = vmatpush1.msra.mxu0 0.0
        %1422 = vmatprep.subr.mxu0 0.0
        %1423 = vmatpush1.msra.mxu0 0.0
        %1424 = vmatprep.subr.mxu0 0.0
        %1425 = vmatpush1.msra.mxu0 0.0
        %1426 = vmatprep.subr.mxu0 0.0
        %1427 = vmatpush1.msra.mxu0 0.0
        %1428 = vmatprep.subr.mxu0 0.0
        %1429 = vmatpush1.msra.mxu0 0.0
        %1430 = vmatprep.subr.mxu0 0.0
        %1431 = vmatpush1.msra.mxu0 0.0
        %1432 = vmatprep.subr.mxu0 0.0
        %1433 = vmatpush1.msra.mxu0 0.0
        %1434 = vmatprep.subr.mxu0 0.0
        %1435 = vmatpush1.msra.mxu0 0.0
        %1436 = vmatprep.subr.mxu0 0.0
        %1437 = vmatpush1.msra.mxu0 0.0
        %1438 = vmatprep.subr.mxu0 0.0
        %1439 = vmatpush1.msra.mxu0 0.0
        %1440 = vmatprep.subr.mxu0 0.0
        %1441 = vmatpush1.msra.mxu0 0.0
        %1442 = vmatprep.subr.mxu0 0.0
        %1443 = vmatpush1.msra.mxu0 0.0
        %1444 = vmatprep.subr.mxu0 0.0
        %1445 = vmatpush1.msra.mxu0 0.0
        %1446 = vmatprep.subr.mxu0 0.0
        %1447 = vmatpush1.msra.mxu0 0.0
        %1448 = vmatprep.subr.mxu0 0.0
        %1449 = vmatpush1.msra.mxu0 0.0
        %1450 = vmatprep.subr.mxu0 0.0
        %1451 = vmatpush1.msra.mxu0 0.0
        %1452 = vmatprep.subr.mxu0 0.0
        %1453 = vmatpush1.msra.mxu0 0.0
        %1454 = vmatprep.subr.mxu0 0.0
        %1455 = vmatpush1.msra.mxu0 0.0
        %1456 = vmatprep.subr.mxu0 0.0
        %1457 = vmatpush1.msra.mxu0 0.0
        %1458 = vmatprep.subr.mxu0 0.0
        %1459 = vmatpush1.msra.mxu0 0.0
        %1460 = vmatprep.subr.mxu0 0.0
        %1461 = vmatpush1.msra.mxu0 0.0
        %1462 = vmatprep.subr.mxu0 0.0
        %1463 = vmatpush1.msra.mxu0 0.0
        %1464 = vmatprep.subr.mxu0 0.0
        %1465 = vmatpush1.msra.mxu0 0.0
        %1466 = vmatprep.subr.mxu0 0.0
        %1467 = vmatpush1.msra.mxu0 0.0
        %1468 = vmatprep.subr.mxu0 0.0
        %1469 = vmatpush1.msra.mxu0 0.0
        %1470 = vmatprep.subr.mxu0 0.0
        %1471 = vmatpush1.msra.mxu0 0.0
        %1472 = vmatprep.mubr.f32.mxu0 0.0
        %1473 = vmatmul.mubr.f32.gmra.mrb[0].mxu0 %v1406
        %v1474 = vpop.f32.mrb[0].mxu0
        %v1475 = vadd.f32 0.0, %v1474
        %v1476 = vpop.f32.mrb[0].mxu0
        %1477 = vdwg.mxu0
        %1479 = vrot.lane.b32.xlu0 %v1475, 24
        %v1480 = vpop.permute.xlu0 %1479
        %vm1482 = vcmask 228544
        %1483 = vst.msk [vmem:[%s234] sm:$0xff] %vm1482, %v1480
        %v1484 = vld [vmem:[%s253] sm:$0xff]
        %s1485 = scalar_lea.vmem %s245, 56
        %v1486 = vld [vmem:[%s1485] sm:$0xff]
        %v1487 = vmul.f32 %v1486, 0.5
        %s1488 = scalar_lea.vmem %s249, 56
        %v1489 = vld [vmem:[%s1488] sm:$0xff]
        %1491 = vrot.lane.b32.xlu0 %v1484, 100
        %v1492 = vpop.permute.xlu0 %1491
        %v1494 = vsel %vm258, %v1487, 0
        %v1496 = vsel %vm258, %v1492, 0
        %1498 = vmatprep.subr.mxu0 0.0
        %1499 = vmatpush1.xpose.msra.mxu0 %v1496
        %1500 = vmatprep.subr.mxu0 0.0
        %1501 = vmatpush1.xpose.msra.mxu0 0.0
        %1502 = vmatprep.subr.mxu0 0.0
        %1503 = vmatpush1.xpose.msra.mxu0 0.0
        %1504 = vmatprep.subr.mxu0 0.0
        %1505 = vmatpush1.xpose.msra.mxu0 0.0
        %1506 = vmatprep.subr.mxu0 0.0
        %1507 = vmatpush1.xpose.msra.mxu0 0.0
        %1508 = vmatprep.subr.mxu0 0.0
        %1509 = vmatpush1.xpose.msra.mxu0 0.0
        %1510 = vmatprep.subr.mxu0 0.0
        %1511 = vmatpush1.xpose.msra.mxu0 0.0
        %1512 = vmatprep.subr.mxu0 0.0
        %1513 = vmatpush1.xpose.msra.mxu0 0.0
        %1514 = vmatprep.subr.mxu0 0.0
        %1515 = vmatpush1.xpose.msra.mxu0 0.0
        %1516 = vmatprep.subr.mxu0 0.0
        %1517 = vmatpush1.xpose.msra.mxu0 0.0
        %1518 = vmatprep.subr.mxu0 0.0
        %1519 = vmatpush1.xpose.msra.mxu0 0.0
        %1520 = vmatprep.subr.mxu0 0.0
        %1521 = vmatpush1.xpose.msra.mxu0 0.0
        %1522 = vmatprep.subr.mxu0 0.0
        %1523 = vmatpush1.xpose.msra.mxu0 0.0
        %1524 = vmatprep.subr.mxu0 0.0
        %1525 = vmatpush1.xpose.msra.mxu0 0.0
        %1526 = vmatprep.subr.mxu0 0.0
        %1527 = vmatpush1.xpose.msra.mxu0 0.0
        %1528 = vmatprep.subr.mxu0 0.0
        %1529 = vmatpush1.xpose.msra.mxu0 0.0
        %1530 = vmatprep.subr.mxu0 0.0
        %1531 = vmatpush1.xpose.msra.mxu0 0.0
        %1532 = vmatprep.subr.mxu0 0.0
        %1533 = vmatpush1.xpose.msra.mxu0 0.0
        %1534 = vmatprep.subr.mxu0 0.0
        %1535 = vmatpush1.xpose.msra.mxu0 0.0
        %1536 = vmatprep.subr.mxu0 0.0
        %1537 = vmatpush1.xpose.msra.mxu0 0.0
        %1538 = vmatprep.subr.mxu0 0.0
        %1539 = vmatpush1.xpose.msra.mxu0 0.0
        %1540 = vmatprep.subr.mxu0 0.0
        %1541 = vmatpush1.xpose.msra.mxu0 0.0
        %1542 = vmatprep.subr.mxu0 0.0
        %1543 = vmatpush1.xpose.msra.mxu0 0.0
        %1544 = vmatprep.subr.mxu0 0.0
        %1545 = vmatpush1.xpose.msra.mxu0 0.0
        %1546 = vmatprep.subr.mxu0 0.0
        %1547 = vmatpush1.xpose.msra.mxu0 0.0
        %1548 = vmatprep.subr.mxu0 0.0
        %1549 = vmatpush1.xpose.msra.mxu0 0.0
        %1550 = vmatprep.subr.mxu0 0.0
        %1551 = vmatpush1.xpose.msra.mxu0 0.0
        %1552 = vmatprep.subr.mxu0 0.0
        %1553 = vmatpush1.xpose.msra.mxu0 0.0
        %1554 = vmatprep.subr.mxu0 0.0
        %1555 = vmatpush1.xpose.msra.mxu0 0.0
        %1556 = vmatprep.subr.mxu0 0.0
        %1557 = vmatpush1.xpose.msra.mxu0 0.0
        %1558 = vmatprep.subr.mxu0 0.0
        %1559 = vmatpush1.xpose.msra.mxu0 0.0
        %1560 = vmatprep.subr.mxu0 0.0
        %1561 = vmatpush1.xpose.msra.mxu0 0.0
        %1562 = vmatprep.mubr.f32.mxu0 0.0
        %1563 = vmatmul.mubr.f32.gmra.mrb[0].mxu0 %v1494
        %v1564 = vpop.f32.mrb[0].mxu0
        %v1565 = vadd.f32 %v1489, %v1564
        %v1566 = vpop.f32.mrb[0].mxu0
        %1567 = vdwg.mxu0
        %v1568 = vsel %vm335, %v1565, -inf
        %1569 = vmax.xlane.f32.xlu0 %v1568
        %v1570 = vpop.xlane.xlu0 %1569
        %v1571 = vsub.f32 %v1565, %v1570
        %v1572 = vmul.f32 %v1571, 1.442695
        %v1573 = vpow.pop %v1572
        %v1574 = vsel %vm335, %v1573, 0.0
        %1575 = vadd.xlane.f32.xlu0 %v1574
        %v1576 = vpop.xlane.xlu0 %1575
        %v1577 = vrcp.pop %v1576
        %v1578 = vmul.f32 %v1573, %v1577
        %s1579 = scalar_lea.vmem %s241, 56 [#allocation4]
        %1580 = vst.msk [vmem:[%s1579] sm:$0xff] %vm335, %v1578
        %v1583 = vsel %vm335, %v1578, 0
        %1585 = vmatprep.subr.mxu0 0.0
        %1586 = vmatpush1.msra.mxu0 %v1492
        %1587 = vmatprep.subr.mxu0 0.0
        %1588 = vmatpush1.msra.mxu0 0.0
        %1589 = vmatprep.subr.mxu0 0.0
        %1590 = vmatpush1.msra.mxu0 0.0
        %1591 = vmatprep.subr.mxu0 0.0
        %1592 = vmatpush1.msra.mxu0 0.0
        %1593 = vmatprep.subr.mxu0 0.0
        %1594 = vmatpush1.msra.mxu0 0.0
        %1595 = vmatprep.subr.mxu0 0.0
        %1596 = vmatpush1.msra.mxu0 0.0
        %1597 = vmatprep.subr.mxu0 0.0
        %1598 = vmatpush1.msra.mxu0 0.0
        %1599 = vmatprep.subr.mxu0 0.0
        %1600 = vmatpush1.msra.mxu0 0.0
        %1601 = vmatprep.subr.mxu0 0.0
        %1602 = vmatpush1.msra.mxu0 0.0
        %1603 = vmatprep.subr.mxu0 0.0
        %1604 = vmatpush1.msra.mxu0 0.0
        %1605 = vmatprep.subr.mxu0 0.0
        %1606 = vmatpush1.msra.mxu0 0.0
        %1607 = vmatprep.subr.mxu0 0.0
        %1608 = vmatpush1.msra.mxu0 0.0
        %1609 = vmatprep.subr.mxu0 0.0
        %1610 = vmatpush1.msra.mxu0 0.0
        %1611 = vmatprep.subr.mxu0 0.0
        %1612 = vmatpush1.msra.mxu0 0.0
        %1613 = vmatprep.subr.mxu0 0.0
        %1614 = vmatpush1.msra.mxu0 0.0
        %1615 = vmatprep.subr.mxu0 0.0
        %1616 = vmatpush1.msra.mxu0 0.0
        %1617 = vmatprep.subr.mxu0 0.0
        %1618 = vmatpush1.msra.mxu0 0.0
        %1619 = vmatprep.subr.mxu0 0.0
        %1620 = vmatpush1.msra.mxu0 0.0
        %1621 = vmatprep.subr.mxu0 0.0
        %1622 = vmatpush1.msra.mxu0 0.0
        %1623 = vmatprep.subr.mxu0 0.0
        %1624 = vmatpush1.msra.mxu0 0.0
        %1625 = vmatprep.subr.mxu0 0.0
        %1626 = vmatpush1.msra.mxu0 0.0
        %1627 = vmatprep.subr.mxu0 0.0
        %1628 = vmatpush1.msra.mxu0 0.0
        %1629 = vmatprep.subr.mxu0 0.0
        %1630 = vmatpush1.msra.mxu0 0.0
        %1631 = vmatprep.subr.mxu0 0.0
        %1632 = vmatpush1.msra.mxu0 0.0
        %1633 = vmatprep.subr.mxu0 0.0
        %1634 = vmatpush1.msra.mxu0 0.0
        %1635 = vmatprep.subr.mxu0 0.0
        %1636 = vmatpush1.msra.mxu0 0.0
        %1637 = vmatprep.subr.mxu0 0.0
        %1638 = vmatpush1.msra.mxu0 0.0
        %1639 = vmatprep.subr.mxu0 0.0
        %1640 = vmatpush1.msra.mxu0 0.0
        %1641 = vmatprep.subr.mxu0 0.0
        %1642 = vmatpush1.msra.mxu0 0.0
        %1643 = vmatprep.subr.mxu0 0.0
        %1644 = vmatpush1.msra.mxu0 0.0
        %1645 = vmatprep.subr.mxu0 0.0
        %1646 = vmatpush1.msra.mxu0 0.0
        %1647 = vmatprep.subr.mxu0 0.0
        %1648 = vmatpush1.msra.mxu0 0.0
        %1649 = vmatprep.mubr.f32.mxu0 0.0
        %1650 = vmatmul.mubr.f32.gmra.mrb[0].mxu0 %v1583
        %v1651 = vpop.f32.mrb[0].mxu0
        %v1652 = vadd.f32 0.0, %v1651
        %v1653 = vpop.f32.mrb[0].mxu0
        %1654 = vdwg.mxu0
        %1656 = vrot.lane.b32.xlu0 %v1652, 28
        %v1657 = vpop.permute.xlu0 %1656
        %vm1659 = vcmask 261344
        %1660 = vst.msk [vmem:[%s234] sm:$0xff] %vm1659, %v1657
        %s1661 = sand.u32 %s122, 1
        %s1662 = scalar_lea.sflag [#allocation3], %s1661
        %s1663 = sand.u32 %s122, 1
        %s1664 = smul.addr %s1663, 8
        %s1665 = scalar_lea.vmem [#allocation2], %s1664
        %s1666 = sand.u32 %s150, 1
        %s1667 = scalar_lea.sflag [#allocation5], %s1666
        %s1668 = sand.u32 %s150, 1
        %s1669 = smul.addr %s1668, 64
        %s1670 = scalar_lea.vmem [#allocation4], %s1669
        // Predicated region
        $region33: #{tpu_custom_call.1} parent=31 // pred_check
          %p1671 = pneg %p132
        $region34: #{tpu_custom_call.1} parent=31 // pred_check_branch
          %1673 = sbr.rel (%p1671) target = $region36
        $region35: #{tpu_custom_call.1} parent=31 // pred_region
          %s1675 = ssub.s32 128, 128
          %1676 = vsyncadd %s1662, %s1675
          %s1677 = sadd.s32 %s27, %s26
          %s1678 = smul.addr %s1677, 128
          %s1679 = scalar_lea.hbm %s3, %s1678
          %s1681 = sshll.u32 %s1665, 4
          %s1682 = int_to_ptr.vmem [resolvable:$true] %s1681
          %1684 = dma.vmem_to_hbm [thread:$0]  %s1682, 128, %s1679, %s1662
        $region36: #{tpu_custom_call.1} parent=31 // pred_fallthru
          _
        // Predicated region
        $region37: #{tpu_custom_call.1} parent=31 // pred_check
          %p1685 = pneg %p160
        $region38: #{tpu_custom_call.1} parent=31 // pred_check_branch
          %1687 = sbr.rel (%p1685) target = $region40
        $region39: #{tpu_custom_call.1} parent=31 // pred_region
          %s1689 = ssub.s32 1024, 1024
          %1690 = vsyncadd %s1667, %s1689
          %s1691 = smul.addr %s26, 8
          %s1692 = sadd.s32 %s27, %s1691
          %s1693 = smul.addr %s1692, 128
          %s1694 = scalar_lea.hbm %s4, %s1693
          %s1695 = sshll.u32 %s1670, 4
          %s1696 = int_to_ptr.vmem [resolvable:$true] %s1695
          %1701 = dma.vmem_to_hbm [thread:$0]  %s1696, 1024, %s1694, %s1667, 128, 128, 8
        $region40: #{tpu_custom_call.1} parent=31 // pred_fallthru
          _
      $region32: #{tpu_custom_call.1} parent=5 // pred_fallthru
        _
      %p1702 = scmp.le.s32.totalorder 2, %s17
      // Predicated region
      $region41: #{tpu_custom_call.1} parent=5 // pred_check
        %p1703 = pneg %p1702
      $region42: #{tpu_custom_call.1} parent=5 // pred_check_branch
        %1705 = sbr.rel (%p1703) target = $region44
      $region43: #{tpu_custom_call.1} parent=5 // pred_region
        %s1706 = ssub.s32 %s17, 2
        // Predicated region
        $region45: #{tpu_custom_call.1} parent=43 // pred_check
          %p1707 = pneg %p138
        $region46: #{tpu_custom_call.1} parent=43 // pred_check_branch
          %1709 = sbr.rel (%p1707) target = $region48
        $region47: #{tpu_custom_call.1} parent=43 // pred_region
          %s1710 = sand.u32 %s123, 1
          %s1711 = scalar_lea.sflag [#allocation3], %s1710
          %s1712 = sand.u32 %s123, 1
          %s1713 = smul.addr %s1712, 8
          %s1714 = scalar_lea.vmem [#allocation2], %s1713
          %1715 = dma.done %s1711, 128
        $region48: #{tpu_custom_call.1} parent=43 // pred_fallthru
          _
        // Predicated region
        $region49: #{tpu_custom_call.1} parent=43 // pred_check
          %p1716 = pneg %p166
        $region50: #{tpu_custom_call.1} parent=43 // pred_check_branch
          %1718 = sbr.rel (%p1716) target = $region52
        $region51: #{tpu_custom_call.1} parent=43 // pred_region
          %s1719 = sand.u32 %s151, 1
          %s1720 = scalar_lea.sflag [#allocation5], %s1719
          %s1721 = sand.u32 %s151, 1
          %s1722 = smul.addr %s1721, 64
          %s1723 = scalar_lea.vmem [#allocation4], %s1722
          %1724 = dma.done %s1720, 1024
        $region52: #{tpu_custom_call.1} parent=43 // pred_fallthru
          _
      $region44: #{tpu_custom_call.1} parent=5 // pred_fallthru
        _
    $region6: #{tpu_custom_call.1} parent=1 // loop_footer
      %s21 = sadd.s32 1, %s17
    $region7: #{tpu_custom_call.1} parent=1 // loop_footer_branch
      %16 = sbr.rel target = $region3
    $region8: #{tpu_custom_call.1} parent=1 // loop_exit
      _
    %1725 = vsyncpa [#allocation3], 1
    %s1726 = scalar_lea.sflag [#allocation3], 1
    %1727 = vsyncpa %s1726, 1
    %1728 = vsyncpa [#allocation5], 1
    %s1729 = scalar_lea.sflag [#allocation5], 1
    %1730 = vsyncpa %s1729, 1

</llo_original>
